<compile_context>
chip_gen: v7x
topology: tpu7x:2x2x1
jax: 0.10.0
libtpu: 0.0.40
codegen_flags: <defaults>
</compile_context>

<pallas_src>
import functools

import jax
import jax.numpy as jnp
from jax.experimental import pallas as pl
from jax.experimental.pallas import tpu as pltpu


def _cbam_kernel(x_ref, w1_ref, w2_ref, wsa_ref, bsa_ref, o_ref, *, H, W, K):
    BB, C, HW = x_ref.shape
    KK = K * K
    PAD = K // 2
    inv_hw = 1.0 / float(HW)
    inv_c = 1.0 / float(C)

    xb = x_ref[...]                                            # (BB, C, HW), lane-dense

    # ---- Channel attention -------------------------------------------------
    # avgpool + contrast (two-pass biased std: sum((x-mean)^2)/(H*W), sqrt, no
    # eps -- exactly PyTorch's stdv_channels) -> tiny SE (1x1 convs) -> sigmoid.
    mean_k = jnp.sum(xb, axis=-1, keepdims=True) * inv_hw      # (BB, C, 1)
    centered = xb - mean_k
    var_k = jnp.sum(centered * centered, axis=-1, keepdims=True) * inv_hw
    s = (mean_k + jnp.sqrt(var_k))[:, :, 0]                    # (BB, C)

    # SE stays on the VPU: (Cr=2, C=32) is far too small to pay MXU push/pop.
    # TODO(synk): switch to jnp.dot (bf16 in, f32 acc) if C/Cr are ever scaled up.
    w1 = w1_ref[...]                                           # (Cr, C)
    w2 = w2_ref[...]                                           # (C, Cr)
    h = jnp.sum(w1[None, :, :] * s[:, None, :], axis=-1)       # (BB, Cr)
    h = jnp.maximum(h, 0.0)
    ca = jax.nn.sigmoid(jnp.sum(w2[None, :, :] * h[:, None, :], axis=-1))  # (BB, C)

    out1 = xb * ca[:, :, None]                                 # (BB, C, HW)

    # ---- Spatial attention ---------------------------------------------------
    max_c = jnp.max(out1, axis=1)                              # (BB, HW)
    mean_c = jnp.sum(out1, axis=1) * inv_c                     # (BB, HW)

    # If out1 would eat a large chunk of the 64-entry vreg file during the tap
    # loop, park it in the VMEM-resident output block and re-read it at the end.
    park_out1 = (BB * C * HW) > 16 * 1024                      # > 16 vregs of f32
    if park_out1:
        o_ref[...] = out1
        del out1

    # Sublane-stack the two maps (max rows first, mean rows second): every roll /
    # select / FMA in the tap loop now covers both maps (and all BB batches).
    stacked = jnp.concatenate([max_c, mean_c], axis=0)         # (2*BB, HW)

    # Per-sublane tap weights: rows 0..BB-1 use the conv's "max" input channel,
    # rows BB..2*BB-1 the "mean" channel.  Built once, statically sliced per tap.
    wsa = wsa_ref[...]                                         # (2, K*K)
    if BB == 1:
        w_rows = wsa
    else:
        w_rows = jnp.concatenate(
            [jnp.broadcast_to(wsa[0:1, :], (BB, KK)),
             jnp.broadcast_to(wsa[1:2, :], (BB, KK))], axis=0)  # (2*BB, K*K)
    bias = bsa_ref[0]

    # Per-tap validity masks on the flat index p = h*W + w (hoisted out of the
    # loop; no vector int-div when W is a power of two).
    pos = jax.lax.broadcasted_iota(jnp.int32, (1, HW), 1)
    if (W & (W - 1)) == 0:
        col = jnp.bitwise_and(pos, W - 1)
    else:
        col = jax.lax.rem(pos, W)
    row_ok = [jnp.logical_and(pos >= (PAD - ki) * W, pos < (H - (ki - PAD)) * W)
              for ki in range(K)]
    col_ok = [jnp.logical_and(col >= (PAD - kj), col < W - (kj - PAD))
              for kj in range(K)]

    # 7x7 conv fully in registers: each tap is a lane roll (XLU slot, overlaps
    # the VPU FMAs), a mask select, and one FMA on the stacked array.  Four
    # partial accumulators break the serial add chain and expose ILP.
    # TODO(synk): for HW >> 1K consider the Toeplitz-matmul (MXU) formulation.
    n_acc = 4
    accs = [jnp.zeros((2 * BB, HW), jnp.float32) for _ in range(n_acc)]
    tap = 0
    for ki in range(K):
        di = ki - PAD
        for kj in range(K):
            dj = kj - PAD
            shift = (-(di * W + dj)) % HW
            t = stacked if shift == 0 else pltpu.roll(stacked, shift, 1)
            if di != 0 or dj != 0:
                valid = jnp.logical_and(row_ok[ki], col_ok[kj])   # (1, HW)
                t = jnp.where(valid, t, 0.0)
            accs[tap % n_acc] = accs[tap % n_acc] + w_rows[:, tap:tap + 1] * t
            tap += 1
    acc = (accs[0] + accs[1]) + (accs[2] + accs[3])             # (2*BB, HW)
    logits = acc[:BB, :] + acc[BB:, :] + bias                   # max half + mean half
    sa = jax.nn.sigmoid(logits)                                 # (BB, HW)

    if park_out1:
        o_ref[...] = o_ref[...] * sa[:, None, :]
    else:
        o_ref[...] = out1 * sa[:, None, :]                      # unmasked lane-dense store


def cbam_block(x, w1, w2, w_sa_flat, b_sa, *, kernel_size=7, block_b=1):
    """CBAM forward. x: (B, C, H, W) f32 -> (B, C, H, W) f32."""
    B, C, H, W = x.shape
    HW = H * W
    K = kernel_size
    Cr = w1.shape[0]
    assert B % block_b == 0, "block_b must divide B"

    # Merging the two trailing contiguous dims of row-major NCHW is a bitcast in
    # XLA (no relayout copy); the flattened spatial axis makes each block
    # lane-dense (HW = 256 = 2x128 lanes here).
    xf = x.reshape(B, C, HW)
    w_sa = w_sa_flat.reshape(2, K * K)

    # Pipelined-VMEM budget: in + out blocks, double-buffered, plus weights.
    # Re-derived per call so scaling block_b also respects v7x's 64 MiB VMEM.
    tile_bytes = block_b * C * HW * 4
    vmem_needed = 2 * 2 * tile_bytes + (2 * Cr * C + 2 * K * K) * 4 + (1 << 20)
    params = dict(dimension_semantics=("parallel",))
    if vmem_needed > (32 << 20):
        params["vmem_limit_bytes"] = min(vmem_needed, 60 << 20)

    kern = functools.partial(_cbam_kernel, H=H, W=W, K=K)
    out = pl.pallas_call(
        kern,
        out_shape=jax.ShapeDtypeStruct((B, C, HW), jnp.float32),
        grid_spec=pltpu.PrefetchScalarGridSpec(
            num_scalar_prefetch=0,
            grid=(B // block_b,),
            in_specs=[
                pl.BlockSpec((block_b, C, HW), lambda b: (b, 0, 0)),   # x (flat spatial)
                pl.BlockSpec((Cr, C), lambda b: (0, 0)),               # SE conv1 weight
                pl.BlockSpec((C, Cr), lambda b: (0, 0)),               # SE conv2 weight
                pl.BlockSpec((2, K * K), lambda b: (0, 0)),            # 7x7 conv weights
                pl.BlockSpec(memory_space=pltpu.MemorySpace.SMEM),     # 7x7 conv bias
            ],
            out_specs=pl.BlockSpec((block_b, C, HW), lambda b: (b, 0, 0)),
        ),
        compiler_params=pltpu.CompilerParams(**params),
    )(xf, w1, w2, w_sa, b_sa)
    return out.reshape(B, C, H, W)


def cbam_ref(x, w1, w2, w_sa_flat, b_sa, *, kernel_size=7):
    """Pure-JAX reference matching the PyTorch forward pass."""
    mean = jnp.mean(x, axis=(2, 3), keepdims=True)
    var = jnp.mean((x - mean) ** 2, axis=(2, 3), keepdims=True)
    s = mean + jnp.sqrt(var)                                   # avgpool + contrast
    h = jnp.einsum('rc,bcij->brij', w1, s, precision=jax.lax.Precision.HIGHEST)
    h = jnp.maximum(h, 0.0)
    ca = jax.nn.sigmoid(
        jnp.einsum('cr,brij->bcij', w2, h, precision=jax.lax.Precision.HIGHEST))
    out1 = x * ca
    maxc = jnp.max(out1, axis=1, keepdims=True)
    meanc = jnp.mean(out1, axis=1, keepdims=True)
    maps = jnp.concatenate([maxc, meanc], axis=1)              # (B, 2, H, W)
    w_sa = w_sa_flat.reshape(1, 2, kernel_size, kernel_size)
    p = kernel_size // 2
    conv = jax.lax.conv_general_dilated(
        maps, w_sa, window_strides=(1, 1), padding=((p, p), (p, p)),
        dimension_numbers=('NCHW', 'OIHW', 'NCHW'),
        precision=jax.lax.Precision.HIGHEST) + b_sa[0]
    sa = jax.nn.sigmoid(conv)
    return out1 * sa


if __name__ == "__main__":
    B, C, H, W = 2, 32, 16, 16
    reduction, kernel_size = 16, 7
    Cr = C // reduction                                        # = 2

    key = jax.random.PRNGKey(0)
    kx, k1, k2, k3, k4 = jax.random.split(key, 5)
    x = jax.random.normal(kx, (B, C, H, W), jnp.float32)
    # Deterministic synthetic parameters (shapes follow the nn.Module __init__):
    w1 = jax.random.normal(k1, (Cr, C), jnp.float32) * 0.2     # Conv2d(C, C//r, 1, bias=False)
    w2 = jax.random.normal(k2, (C, Cr), jnp.float32) * 0.2     # Conv2d(C//r, C, 1, bias=False)
    w_sa = jax.random.normal(k3, (2 * kernel_size * kernel_size,), jnp.float32) * 0.1
    b_sa = jax.random.normal(k4, (1,), jnp.float32) * 0.1      # Conv2d(2, 1, 7, pad=3) w/ bias

    # block_b=1 keeps the grid length 2 (even) so v7x can use both TensorCores.
    out = cbam_block(x, w1, w2, w_sa, b_sa, kernel_size=kernel_size, block_b=1)
    out = jax.block_until_ready(out)

    ref = cbam_ref(x, w1, w2, w_sa, b_sa, kernel_size=kernel_size)
    assert out.shape == (B, C, H, W)
    max_err = float(jnp.max(jnp.abs(out - ref)))
    assert jnp.allclose(out, ref, atol=1e-3, rtol=1e-3), f"max abs err {max_err}"

    print("KERNEL_OK")
</pallas_src>

<mosaic_0001>
module attributes {stable_mosaic.version = 11 : i64} {
  func.func @_cbam_kernel(%arg0: i32, %arg1: memref<1x32x256xf32, #tpu.memory_space<vmem>>, %arg2: memref<2x32xf32, #tpu.memory_space<vmem>>, %arg3: memref<32x2xf32, #tpu.memory_space<vmem>>, %arg4: memref<2x49xf32, #tpu.memory_space<vmem>>, %arg5: memref<1xf32, #tpu.memory_space<smem>>, %arg6: memref<1x32x256xf32, #tpu.memory_space<vmem>>) attributes {dimension_semantics = [#tpu.dimension_semantics<parallel>], iteration_bounds = array<i64: 2>, scalar_prefetch = 0 : i64, scratch_operands = 0 : i64, tpu.core_type = #tpu.core_type<tc>, window_params = [{transform_indices = @transform_0, window_bounds = array<i64: 1, 32, 256>}, {pipeline_mode = #tpu.pipeline_mode<synchronous>, transform_indices = @transform_1, window_bounds = array<i64: 2, 32>}, {pipeline_mode = #tpu.pipeline_mode<synchronous>, transform_indices = @transform_2, window_bounds = array<i64: 32, 2>}, {pipeline_mode = #tpu.pipeline_mode<synchronous>, transform_indices = @transform_3, window_bounds = array<i64: 2, 49>}, {transform_indices = @transform_4, window_bounds = array<i64: 1>}, {transform_indices = @transform_5, window_bounds = array<i64: 1, 32, 256>}]} {
    %c0 = arith.constant 0 : index
    %c0_0 = arith.constant 0 : index
    %c0_1 = arith.constant 0 : index
    %0 = vector.load %arg1[%c0, %c0_0, %c0_1] : memref<1x32x256xf32, #tpu.memory_space<vmem>>, vector<1x32x256xf32>
    %cst = arith.constant dense<0.000000e+00> : vector<1x32xf32>
    %1 = vector.multi_reduction <add>, %0, %cst [2] : vector<1x32x256xf32> to vector<1x32xf32>
    %2 = vector.shape_cast %1 : vector<1x32xf32> to vector<1x32x1xf32>
    %cst_2 = arith.constant 3.906250e-03 : f32
    %3 = vector.broadcast %cst_2 : f32 to vector<1x32x1xf32>
    %4 = arith.mulf %2, %3 : vector<1x32x1xf32>
    %5 = vector.broadcast %4 : vector<1x32x1xf32> to vector<1x32x256xf32>
    %6 = arith.subf %0, %5 : vector<1x32x256xf32>
    %7 = arith.mulf %6, %6 : vector<1x32x256xf32>
    %cst_3 = arith.constant dense<0.000000e+00> : vector<1x32xf32>
    %8 = vector.multi_reduction <add>, %7, %cst_3 [2] : vector<1x32x256xf32> to vector<1x32xf32>
    %9 = vector.shape_cast %8 : vector<1x32xf32> to vector<1x32x1xf32>
    %cst_4 = arith.constant 3.906250e-03 : f32
    %10 = vector.broadcast %cst_4 : f32 to vector<1x32x1xf32>
    %11 = arith.mulf %9, %10 : vector<1x32x1xf32>
    %12 = math.sqrt %11 : vector<1x32x1xf32>
    %13 = arith.addf %4, %12 : vector<1x32x1xf32>
    %14 = vector.shape_cast %13 : vector<1x32x1xf32> to vector<1x32xf32>
    %c0_5 = arith.constant 0 : index
    %c0_6 = arith.constant 0 : index
    %15 = vector.load %arg2[%c0_5, %c0_6] : memref<2x32xf32, #tpu.memory_space<vmem>>, vector<2x32xf32>
    %c0_7 = arith.constant 0 : index
    %c0_8 = arith.constant 0 : index
    %16 = vector.load %arg3[%c0_7, %c0_8] : memref<32x2xf32, #tpu.memory_space<vmem>>, vector<32x2xf32>
    %17 = vector.shape_cast %15 : vector<2x32xf32> to vector<1x2x32xf32>
    %18 = vector.shape_cast %14 : vector<1x32xf32> to vector<1x1x32xf32>
    %19 = vector.broadcast %18 : vector<1x1x32xf32> to vector<1x2x32xf32>
    %20 = arith.mulf %17, %19 : vector<1x2x32xf32>
    %cst_9 = arith.constant dense<0.000000e+00> : vector<1x2xf32>
    %21 = vector.multi_reduction <add>, %20, %cst_9 [2] : vector<1x2x32xf32> to vector<1x2xf32>
    %cst_10 = arith.constant 0.000000e+00 : f32
    %22 = vector.broadcast %cst_10 : f32 to vector<1x2xf32>
    %23 = arith.maximumf %21, %22 : vector<1x2xf32>
    %24 = vector.shape_cast %16 : vector<32x2xf32> to vector<1x32x2xf32>
    %25 = vector.shape_cast %23 : vector<1x2xf32> to vector<1x1x2xf32>
    %26 = vector.broadcast %25 : vector<1x1x2xf32> to vector<1x32x2xf32>
    %27 = arith.mulf %24, %26 : vector<1x32x2xf32>
    %cst_11 = arith.constant dense<0.000000e+00> : vector<1x32xf32>
    %28 = vector.multi_reduction <add>, %27, %cst_11 [2] : vector<1x32x2xf32> to vector<1x32xf32>
    %29 = arith.negf %28 : vector<1x32xf32>
    %30 = math.exp %29 : vector<1x32xf32>
    %cst_12 = arith.constant 1.000000e+00 : f32
    %31 = vector.broadcast %cst_12 : f32 to vector<1x32xf32>
    %32 = arith.addf %31, %30 : vector<1x32xf32>
    %33 = arith.divf %31, %32 : vector<1x32xf32>
    %34 = vector.shape_cast %33 : vector<1x32xf32> to vector<1x32x1xf32>
    %35 = vector.broadcast %34 : vector<1x32x1xf32> to vector<1x32x256xf32>
    %36 = arith.mulf %0, %35 : vector<1x32x256xf32>
    %cst_13 = arith.constant dense<0xFF800000> : vector<1x256xf32>
    %37 = vector.multi_reduction <maximumf>, %36, %cst_13 [1] : vector<1x32x256xf32> to vector<1x256xf32>
    %cst_14 = arith.constant dense<0.000000e+00> : vector<1x256xf32>
    %38 = vector.multi_reduction <add>, %36, %cst_14 [1] : vector<1x32x256xf32> to vector<1x256xf32>
    %cst_15 = arith.constant 3.125000e-02 : f32
    %39 = vector.broadcast %cst_15 : f32 to vector<1x256xf32>
    %40 = arith.mulf %38, %39 : vector<1x256xf32>
    %41 = tpu.concatenate %37, %40 in 0 : vector<1x256xf32>, vector<1x256xf32> -> vector<2x256xf32>
    %c0_16 = arith.constant 0 : index
    %c0_17 = arith.constant 0 : index
    %42 = vector.load %arg4[%c0_16, %c0_17] : memref<2x49xf32, #tpu.memory_space<vmem>>, vector<2x49xf32>
    %c0_18 = arith.constant 0 : index
    %43 = memref.load %arg5[%c0_18] : memref<1xf32, #tpu.memory_space<smem>>
    %44 = tpu.iota {dimensions = array<i32: 1>} : vector<1x256xi32>
    %c15_i32 = arith.constant 15 : i32
    %45 = vector.broadcast %c15_i32 : i32 to vector<1x256xi32>
    %46 = arith.andi %44, %45 : vector<1x256xi32>
    %c48_i32 = arith.constant 48 : i32
    %47 = vector.broadcast %c48_i32 : i32 to vector<1x256xi32>
    %48 = arith.cmpi sge, %44, %47 : vector<1x256xi32>
    %c304_i32 = arith.constant 304 : i32
    %49 = vector.broadcast %c304_i32 : i32 to vector<1x256xi32>
    %50 = arith.cmpi slt, %44, %49 : vector<1x256xi32>
    %51 = arith.andi %48, %50 : vector<1x256xi1>
    %c32_i32 = arith.constant 32 : i32
    %52 = vector.broadcast %c32_i32 : i32 to vector<1x256xi32>
    %53 = arith.cmpi sge, %44, %52 : vector<1x256xi32>
    %c288_i32 = arith.constant 288 : i32
    %54 = vector.broadcast %c288_i32 : i32 to vector<1x256xi32>
    %55 = arith.cmpi slt, %44, %54 : vector<1x256xi32>
    %56 = arith.andi %53, %55 : vector<1x256xi1>
    %c16_i32 = arith.constant 16 : i32
    %57 = vector.broadcast %c16_i32 : i32 to vector<1x256xi32>
    %58 = arith.cmpi sge, %44, %57 : vector<1x256xi32>
    %c272_i32 = arith.constant 272 : i32
    %59 = vector.broadcast %c272_i32 : i32 to vector<1x256xi32>
    %60 = arith.cmpi slt, %44, %59 : vector<1x256xi32>
    %61 = arith.andi %58, %60 : vector<1x256xi1>
    %c0_i32 = arith.constant 0 : i32
    %62 = vector.broadcast %c0_i32 : i32 to vector<1x256xi32>
    %63 = arith.cmpi sge, %44, %62 : vector<1x256xi32>
    %c256_i32 = arith.constant 256 : i32
    %64 = vector.broadcast %c256_i32 : i32 to vector<1x256xi32>
    %65 = arith.cmpi slt, %44, %64 : vector<1x256xi32>
    %66 = arith.andi %63, %65 : vector<1x256xi1>
    %c-16_i32 = arith.constant -16 : i32
    %67 = vector.broadcast %c-16_i32 : i32 to vector<1x256xi32>
    %68 = arith.cmpi sge, %44, %67 : vector<1x256xi32>
    %c240_i32 = arith.constant 240 : i32
    %69 = vector.broadcast %c240_i32 : i32 to vector<1x256xi32>
    %70 = arith.cmpi slt, %44, %69 : vector<1x256xi32>
    %71 = arith.andi %68, %70 : vector<1x256xi1>
    %c-32_i32 = arith.constant -32 : i32
    %72 = vector.broadcast %c-32_i32 : i32 to vector<1x256xi32>
    %73 = arith.cmpi sge, %44, %72 : vector<1x256xi32>
    %c224_i32 = arith.constant 224 : i32
    %74 = vector.broadcast %c224_i32 : i32 to vector<1x256xi32>
    %75 = arith.cmpi slt, %44, %74 : vector<1x256xi32>
    %76 = arith.andi %73, %75 : vector<1x256xi1>
    %c-48_i32 = arith.constant -48 : i32
    %77 = vector.broadcast %c-48_i32 : i32 to vector<1x256xi32>
    %78 = arith.cmpi sge, %44, %77 : vector<1x256xi32>
    %c208_i32 = arith.constant 208 : i32
    %79 = vector.broadcast %c208_i32 : i32 to vector<1x256xi32>
    %80 = arith.cmpi slt, %44, %79 : vector<1x256xi32>
    %81 = arith.andi %78, %80 : vector<1x256xi1>
    %c3_i32 = arith.constant 3 : i32
    %82 = vector.broadcast %c3_i32 : i32 to vector<1x256xi32>
    %83 = arith.cmpi sge, %46, %82 : vector<1x256xi32>
    %c19_i32 = arith.constant 19 : i32
    %84 = vector.broadcast %c19_i32 : i32 to vector<1x256xi32>
    %85 = arith.cmpi slt, %46, %84 : vector<1x256xi32>
    %86 = arith.andi %83, %85 : vector<1x256xi1>
    %c2_i32 = arith.constant 2 : i32
    %87 = vector.broadcast %c2_i32 : i32 to vector<1x256xi32>
    %88 = arith.cmpi sge, %46, %87 : vector<1x256xi32>
    %c18_i32 = arith.constant 18 : i32
    %89 = vector.broadcast %c18_i32 : i32 to vector<1x256xi32>
    %90 = arith.cmpi slt, %46, %89 : vector<1x256xi32>
    %91 = arith.andi %88, %90 : vector<1x256xi1>
    %c1_i32 = arith.constant 1 : i32
    %92 = vector.broadcast %c1_i32 : i32 to vector<1x256xi32>
    %93 = arith.cmpi sge, %46, %92 : vector<1x256xi32>
    %c17_i32 = arith.constant 17 : i32
    %94 = vector.broadcast %c17_i32 : i32 to vector<1x256xi32>
    %95 = arith.cmpi slt, %46, %94 : vector<1x256xi32>
    %96 = arith.andi %93, %95 : vector<1x256xi1>
    %c0_i32_19 = arith.constant 0 : i32
    %97 = vector.broadcast %c0_i32_19 : i32 to vector<1x256xi32>
    %98 = arith.cmpi sge, %46, %97 : vector<1x256xi32>
    %c16_i32_20 = arith.constant 16 : i32
    %99 = vector.broadcast %c16_i32_20 : i32 to vector<1x256xi32>
    %100 = arith.cmpi slt, %46, %99 : vector<1x256xi32>
    %101 = arith.andi %98, %100 : vector<1x256xi1>
    %c-1_i32 = arith.constant -1 : i32
    %102 = vector.broadcast %c-1_i32 : i32 to vector<1x256xi32>
    %103 = arith.cmpi sge, %46, %102 : vector<1x256xi32>
    %c15_i32_21 = arith.constant 15 : i32
    %104 = vector.broadcast %c15_i32_21 : i32 to vector<1x256xi32>
    %105 = arith.cmpi slt, %46, %104 : vector<1x256xi32>
    %106 = arith.andi %103, %105 : vector<1x256xi1>
    %c-2_i32 = arith.constant -2 : i32
    %107 = vector.broadcast %c-2_i32 : i32 to vector<1x256xi32>
    %108 = arith.cmpi sge, %46, %107 : vector<1x256xi32>
    %c14_i32 = arith.constant 14 : i32
    %109 = vector.broadcast %c14_i32 : i32 to vector<1x256xi32>
    %110 = arith.cmpi slt, %46, %109 : vector<1x256xi32>
    %111 = arith.andi %108, %110 : vector<1x256xi1>
    %c-3_i32 = arith.constant -3 : i32
    %112 = vector.broadcast %c-3_i32 : i32 to vector<1x256xi32>
    %113 = arith.cmpi sge, %46, %112 : vector<1x256xi32>
    %c13_i32 = arith.constant 13 : i32
    %114 = vector.broadcast %c13_i32 : i32 to vector<1x256xi32>
    %115 = arith.cmpi slt, %46, %114 : vector<1x256xi32>
    %116 = arith.andi %113, %115 : vector<1x256xi1>
    %cst_22 = arith.constant 0.000000e+00 : f32
    %117 = vector.broadcast %cst_22 : f32 to vector<2x256xf32>
    %cst_23 = arith.constant 0.000000e+00 : f32
    %118 = vector.broadcast %cst_23 : f32 to vector<2x256xf32>
    %cst_24 = arith.constant 0.000000e+00 : f32
    %119 = vector.broadcast %cst_24 : f32 to vector<2x256xf32>
    %cst_25 = arith.constant 0.000000e+00 : f32
    %120 = vector.broadcast %cst_25 : f32 to vector<2x256xf32>
    %c51_i32 = arith.constant 51 : i32
    %121 = tpu.dynamic_rotate %41 by %c51_i32 dim 1 : vector<2x256xf32>, i32 -> vector<2x256xf32>
    %122 = arith.andi %51, %86 : vector<1x256xi1>
    %cst_26 = arith.constant 0.000000e+00 : f32
    %123 = vector.shape_cast %122 : vector<1x256xi1> to vector<1x256xi1>
    %124 = vector.broadcast %123 : vector<1x256xi1> to vector<2x256xi1>
    %125 = vector.broadcast %cst_26 : f32 to vector<2x256xf32>
    %126 = arith.select %124, %121, %125 : vector<2x256xi1>, vector<2x256xf32>
    %127 = vector.extract_strided_slice %42 {offsets = [0, 0], sizes = [2, 1], strides = [1, 1]} : vector<2x49xf32> to vector<2x1xf32>
    %128 = vector.broadcast %127 : vector<2x1xf32> to vector<2x256xf32>
    %129 = arith.mulf %128, %126 : vector<2x256xf32>
    %130 = arith.addf %117, %129 : vector<2x256xf32>
    %c50_i32 = arith.constant 50 : i32
    %131 = tpu.dynamic_rotate %41 by %c50_i32 dim 1 : vector<2x256xf32>, i32 -> vector<2x256xf32>
    %132 = arith.andi %51, %91 : vector<1x256xi1>
    %cst_27 = arith.constant 0.000000e+00 : f32
    %133 = vector.shape_cast %132 : vector<1x256xi1> to vector<1x256xi1>
    %134 = vector.broadcast %133 : vector<1x256xi1> to vector<2x256xi1>
    %135 = vector.broadcast %cst_27 : f32 to vector<2x256xf32>
    %136 = arith.select %134, %131, %135 : vector<2x256xi1>, vector<2x256xf32>
    %137 = vector.extract_strided_slice %42 {offsets = [0, 1], sizes = [2, 1], strides = [1, 1]} : vector<2x49xf32> to vector<2x1xf32>
    %138 = vector.broadcast %137 : vector<2x1xf32> to vector<2x256xf32>
    %139 = arith.mulf %138, %136 : vector<2x256xf32>
    %140 = arith.addf %118, %139 : vector<2x256xf32>
    %c49_i32 = arith.constant 49 : i32
    %141 = tpu.dynamic_rotate %41 by %c49_i32 dim 1 : vector<2x256xf32>, i32 -> vector<2x256xf32>
    %142 = arith.andi %51, %96 : vector<1x256xi1>
    %cst_28 = arith.constant 0.000000e+00 : f32
    %143 = vector.shape_cast %142 : vector<1x256xi1> to vector<1x256xi1>
    %144 = vector.broadcast %143 : vector<1x256xi1> to vector<2x256xi1>
    %145 = vector.broadcast %cst_28 : f32 to vector<2x256xf32>
    %146 = arith.select %144, %141, %145 : vector<2x256xi1>, vector<2x256xf32>
    %147 = vector.extract_strided_slice %42 {offsets = [0, 2], sizes = [2, 1], strides = [1, 1]} : vector<2x49xf32> to vector<2x1xf32>
    %148 = vector.broadcast %147 : vector<2x1xf32> to vector<2x256xf32>
    %149 = arith.mulf %148, %146 : vector<2x256xf32>
    %150 = arith.addf %119, %149 : vector<2x256xf32>
    %c48_i32_29 = arith.constant 48 : i32
    %151 = tpu.dynamic_rotate %41 by %c48_i32_29 dim 1 : vector<2x256xf32>, i32 -> vector<2x256xf32>
    %152 = arith.andi %51, %101 : vector<1x256xi1>
    %cst_30 = arith.constant 0.000000e+00 : f32
    %153 = vector.shape_cast %152 : vector<1x256xi1> to vector<1x256xi1>
    %154 = vector.broadcast %153 : vector<1x256xi1> to vector<2x256xi1>
    %155 = vector.broadcast %cst_30 : f32 to vector<2x256xf32>
    %156 = arith.select %154, %151, %155 : vector<2x256xi1>, vector<2x256xf32>
    %157 = vector.extract_strided_slice %42 {offsets = [0, 3], sizes = [2, 1], strides = [1, 1]} : vector<2x49xf32> to vector<2x1xf32>
    %158 = vector.broadcast %157 : vector<2x1xf32> to vector<2x256xf32>
    %159 = arith.mulf %158, %156 : vector<2x256xf32>
    %160 = arith.addf %120, %159 : vector<2x256xf32>
    %c47_i32 = arith.constant 47 : i32
    %161 = tpu.dynamic_rotate %41 by %c47_i32 dim 1 : vector<2x256xf32>, i32 -> vector<2x256xf32>
    %162 = arith.andi %51, %106 : vector<1x256xi1>
    %cst_31 = arith.constant 0.000000e+00 : f32
    %163 = vector.shape_cast %162 : vector<1x256xi1> to vector<1x256xi1>
    %164 = vector.broadcast %163 : vector<1x256xi1> to vector<2x256xi1>
    %165 = vector.broadcast %cst_31 : f32 to vector<2x256xf32>
    %166 = arith.select %164, %161, %165 : vector<2x256xi1>, vector<2x256xf32>
    %167 = vector.extract_strided_slice %42 {offsets = [0, 4], sizes = [2, 1], strides = [1, 1]} : vector<2x49xf32> to vector<2x1xf32>
    %168 = vector.broadcast %167 : vector<2x1xf32> to vector<2x256xf32>
    %169 = arith.mulf %168, %166 : vector<2x256xf32>
    %170 = arith.addf %130, %169 : vector<2x256xf32>
    %c46_i32 = arith.constant 46 : i32
    %171 = tpu.dynamic_rotate %41 by %c46_i32 dim 1 : vector<2x256xf32>, i32 -> vector<2x256xf32>
    %172 = arith.andi %51, %111 : vector<1x256xi1>
    %cst_32 = arith.constant 0.000000e+00 : f32
    %173 = vector.shape_cast %172 : vector<1x256xi1> to vector<1x256xi1>
    %174 = vector.broadcast %173 : vector<1x256xi1> to vector<2x256xi1>
    %175 = vector.broadcast %cst_32 : f32 to vector<2x256xf32>
    %176 = arith.select %174, %171, %175 : vector<2x256xi1>, vector<2x256xf32>
    %177 = vector.extract_strided_slice %42 {offsets = [0, 5], sizes = [2, 1], strides = [1, 1]} : vector<2x49xf32> to vector<2x1xf32>
    %178 = vector.broadcast %177 : vector<2x1xf32> to vector<2x256xf32>
    %179 = arith.mulf %178, %176 : vector<2x256xf32>
    %180 = arith.addf %140, %179 : vector<2x256xf32>
    %c45_i32 = arith.constant 45 : i32
    %181 = tpu.dynamic_rotate %41 by %c45_i32 dim 1 : vector<2x256xf32>, i32 -> vector<2x256xf32>
    %182 = arith.andi %51, %116 : vector<1x256xi1>
    %cst_33 = arith.constant 0.000000e+00 : f32
    %183 = vector.shape_cast %182 : vector<1x256xi1> to vector<1x256xi1>
    %184 = vector.broadcast %183 : vector<1x256xi1> to vector<2x256xi1>
    %185 = vector.broadcast %cst_33 : f32 to vector<2x256xf32>
    %186 = arith.select %184, %181, %185 : vector<2x256xi1>, vector<2x256xf32>
    %187 = vector.extract_strided_slice %42 {offsets = [0, 6], sizes = [2, 1], strides = [1, 1]} : vector<2x49xf32> to vector<2x1xf32>
    %188 = vector.broadcast %187 : vector<2x1xf32> to vector<2x256xf32>
    %189 = arith.mulf %188, %186 : vector<2x256xf32>
    %190 = arith.addf %150, %189 : vector<2x256xf32>
    %c35_i32 = arith.constant 35 : i32
    %191 = tpu.dynamic_rotate %41 by %c35_i32 dim 1 : vector<2x256xf32>, i32 -> vector<2x256xf32>
    %192 = arith.andi %56, %86 : vector<1x256xi1>
    %cst_34 = arith.constant 0.000000e+00 : f32
    %193 = vector.shape_cast %192 : vector<1x256xi1> to vector<1x256xi1>
    %194 = vector.broadcast %193 : vector<1x256xi1> to vector<2x256xi1>
    %195 = vector.broadcast %cst_34 : f32 to vector<2x256xf32>
    %196 = arith.select %194, %191, %195 : vector<2x256xi1>, vector<2x256xf32>
    %197 = vector.extract_strided_slice %42 {offsets = [0, 7], sizes = [2, 1], strides = [1, 1]} : vector<2x49xf32> to vector<2x1xf32>
    %198 = vector.broadcast %197 : vector<2x1xf32> to vector<2x256xf32>
    %199 = arith.mulf %198, %196 : vector<2x256xf32>
    %200 = arith.addf %160, %199 : vector<2x256xf32>
    %c34_i32 = arith.constant 34 : i32
    %201 = tpu.dynamic_rotate %41 by %c34_i32 dim 1 : vector<2x256xf32>, i32 -> vector<2x256xf32>
    %202 = arith.andi %56, %91 : vector<1x256xi1>
    %cst_35 = arith.constant 0.000000e+00 : f32
    %203 = vector.shape_cast %202 : vector<1x256xi1> to vector<1x256xi1>
    %204 = vector.broadcast %203 : vector<1x256xi1> to vector<2x256xi1>
    %205 = vector.broadcast %cst_35 : f32 to vector<2x256xf32>
    %206 = arith.select %204, %201, %205 : vector<2x256xi1>, vector<2x256xf32>
    %207 = vector.extract_strided_slice %42 {offsets = [0, 8], sizes = [2, 1], strides = [1, 1]} : vector<2x49xf32> to vector<2x1xf32>
    %208 = vector.broadcast %207 : vector<2x1xf32> to vector<2x256xf32>
    %209 = arith.mulf %208, %206 : vector<2x256xf32>
    %210 = arith.addf %170, %209 : vector<2x256xf32>
    %c33_i32 = arith.constant 33 : i32
    %211 = tpu.dynamic_rotate %41 by %c33_i32 dim 1 : vector<2x256xf32>, i32 -> vector<2x256xf32>
    %212 = arith.andi %56, %96 : vector<1x256xi1>
    %cst_36 = arith.constant 0.000000e+00 : f32
    %213 = vector.shape_cast %212 : vector<1x256xi1> to vector<1x256xi1>
    %214 = vector.broadcast %213 : vector<1x256xi1> to vector<2x256xi1>
    %215 = vector.broadcast %cst_36 : f32 to vector<2x256xf32>
    %216 = arith.select %214, %211, %215 : vector<2x256xi1>, vector<2x256xf32>
    %217 = vector.extract_strided_slice %42 {offsets = [0, 9], sizes = [2, 1], strides = [1, 1]} : vector<2x49xf32> to vector<2x1xf32>
    %218 = vector.broadcast %217 : vector<2x1xf32> to vector<2x256xf32>
    %219 = arith.mulf %218, %216 : vector<2x256xf32>
    %220 = arith.addf %180, %219 : vector<2x256xf32>
    %c32_i32_37 = arith.constant 32 : i32
    %221 = tpu.dynamic_rotate %41 by %c32_i32_37 dim 1 : vector<2x256xf32>, i32 -> vector<2x256xf32>
    %222 = arith.andi %56, %101 : vector<1x256xi1>
    %cst_38 = arith.constant 0.000000e+00 : f32
    %223 = vector.shape_cast %222 : vector<1x256xi1> to vector<1x256xi1>
    %224 = vector.broadcast %223 : vector<1x256xi1> to vector<2x256xi1>
    %225 = vector.broadcast %cst_38 : f32 to vector<2x256xf32>
    %226 = arith.select %224, %221, %225 : vector<2x256xi1>, vector<2x256xf32>
    %227 = vector.extract_strided_slice %42 {offsets = [0, 10], sizes = [2, 1], strides = [1, 1]} : vector<2x49xf32> to vector<2x1xf32>
    %228 = vector.broadcast %227 : vector<2x1xf32> to vector<2x256xf32>
    %229 = arith.mulf %228, %226 : vector<2x256xf32>
    %230 = arith.addf %190, %229 : vector<2x256xf32>
    %c31_i32 = arith.constant 31 : i32
    %231 = tpu.dynamic_rotate %41 by %c31_i32 dim 1 : vector<2x256xf32>, i32 -> vector<2x256xf32>
    %232 = arith.andi %56, %106 : vector<1x256xi1>
    %cst_39 = arith.constant 0.000000e+00 : f32
    %233 = vector.shape_cast %232 : vector<1x256xi1> to vector<1x256xi1>
    %234 = vector.broadcast %233 : vector<1x256xi1> to vector<2x256xi1>
    %235 = vector.broadcast %cst_39 : f32 to vector<2x256xf32>
    %236 = arith.select %234, %231, %235 : vector<2x256xi1>, vector<2x256xf32>
    %237 = vector.extract_strided_slice %42 {offsets = [0, 11], sizes = [2, 1], strides = [1, 1]} : vector<2x49xf32> to vector<2x1xf32>
    %238 = vector.broadcast %237 : vector<2x1xf32> to vector<2x256xf32>
    %239 = arith.mulf %238, %236 : vector<2x256xf32>
    %240 = arith.addf %200, %239 : vector<2x256xf32>
    %c30_i32 = arith.constant 30 : i32
    %241 = tpu.dynamic_rotate %41 by %c30_i32 dim 1 : vector<2x256xf32>, i32 -> vector<2x256xf32>
    %242 = arith.andi %56, %111 : vector<1x256xi1>
    %cst_40 = arith.constant 0.000000e+00 : f32
    %243 = vector.shape_cast %242 : vector<1x256xi1> to vector<1x256xi1>
    %244 = vector.broadcast %243 : vector<1x256xi1> to vector<2x256xi1>
    %245 = vector.broadcast %cst_40 : f32 to vector<2x256xf32>
    %246 = arith.select %244, %241, %245 : vector<2x256xi1>, vector<2x256xf32>
    %247 = vector.extract_strided_slice %42 {offsets = [0, 12], sizes = [2, 1], strides = [1, 1]} : vector<2x49xf32> to vector<2x1xf32>
    %248 = vector.broadcast %247 : vector<2x1xf32> to vector<2x256xf32>
    %249 = arith.mulf %248, %246 : vector<2x256xf32>
    %250 = arith.addf %210, %249 : vector<2x256xf32>
    %c29_i32 = arith.constant 29 : i32
    %251 = tpu.dynamic_rotate %41 by %c29_i32 dim 1 : vector<2x256xf32>, i32 -> vector<2x256xf32>
    %252 = arith.andi %56, %116 : vector<1x256xi1>
    %cst_41 = arith.constant 0.000000e+00 : f32
    %253 = vector.shape_cast %252 : vector<1x256xi1> to vector<1x256xi1>
    %254 = vector.broadcast %253 : vector<1x256xi1> to vector<2x256xi1>
    %255 = vector.broadcast %cst_41 : f32 to vector<2x256xf32>
    %256 = arith.select %254, %251, %255 : vector<2x256xi1>, vector<2x256xf32>
    %257 = vector.extract_strided_slice %42 {offsets = [0, 13], sizes = [2, 1], strides = [1, 1]} : vector<2x49xf32> to vector<2x1xf32>
    %258 = vector.broadcast %257 : vector<2x1xf32> to vector<2x256xf32>
    %259 = arith.mulf %258, %256 : vector<2x256xf32>
    %260 = arith.addf %220, %259 : vector<2x256xf32>
    %c19_i32_42 = arith.constant 19 : i32
    %261 = tpu.dynamic_rotate %41 by %c19_i32_42 dim 1 : vector<2x256xf32>, i32 -> vector<2x256xf32>
    %262 = arith.andi %61, %86 : vector<1x256xi1>
    %cst_43 = arith.constant 0.000000e+00 : f32
    %263 = vector.shape_cast %262 : vector<1x256xi1> to vector<1x256xi1>
    %264 = vector.broadcast %263 : vector<1x256xi1> to vector<2x256xi1>
    %265 = vector.broadcast %cst_43 : f32 to vector<2x256xf32>
    %266 = arith.select %264, %261, %265 : vector<2x256xi1>, vector<2x256xf32>
    %267 = vector.extract_strided_slice %42 {offsets = [0, 14], sizes = [2, 1], strides = [1, 1]} : vector<2x49xf32> to vector<2x1xf32>
    %268 = vector.broadcast %267 : vector<2x1xf32> to vector<2x256xf32>
    %269 = arith.mulf %268, %266 : vector<2x256xf32>
    %270 = arith.addf %230, %269 : vector<2x256xf32>
    %c18_i32_44 = arith.constant 18 : i32
    %271 = tpu.dynamic_rotate %41 by %c18_i32_44 dim 1 : vector<2x256xf32>, i32 -> vector<2x256xf32>
    %272 = arith.andi %61, %91 : vector<1x256xi1>
    %cst_45 = arith.constant 0.000000e+00 : f32
    %273 = vector.shape_cast %272 : vector<1x256xi1> to vector<1x256xi1>
    %274 = vector.broadcast %273 : vector<1x256xi1> to vector<2x256xi1>
    %275 = vector.broadcast %cst_45 : f32 to vector<2x256xf32>
    %276 = arith.select %274, %271, %275 : vector<2x256xi1>, vector<2x256xf32>
    %277 = vector.extract_strided_slice %42 {offsets = [0, 15], sizes = [2, 1], strides = [1, 1]} : vector<2x49xf32> to vector<2x1xf32>
    %278 = vector.broadcast %277 : vector<2x1xf32> to vector<2x256xf32>
    %279 = arith.mulf %278, %276 : vector<2x256xf32>
    %280 = arith.addf %240, %279 : vector<2x256xf32>
    %c17_i32_46 = arith.constant 17 : i32
    %281 = tpu.dynamic_rotate %41 by %c17_i32_46 dim 1 : vector<2x256xf32>, i32 -> vector<2x256xf32>
    %282 = arith.andi %61, %96 : vector<1x256xi1>
    %cst_47 = arith.constant 0.000000e+00 : f32
    %283 = vector.shape_cast %282 : vector<1x256xi1> to vector<1x256xi1>
    %284 = vector.broadcast %283 : vector<1x256xi1> to vector<2x256xi1>
    %285 = vector.broadcast %cst_47 : f32 to vector<2x256xf32>
    %286 = arith.select %284, %281, %285 : vector<2x256xi1>, vector<2x256xf32>
    %287 = vector.extract_strided_slice %42 {offsets = [0, 16], sizes = [2, 1], strides = [1, 1]} : vector<2x49xf32> to vector<2x1xf32>
    %288 = vector.broadcast %287 : vector<2x1xf32> to vector<2x256xf32>
    %289 = arith.mulf %288, %286 : vector<2x256xf32>
    %290 = arith.addf %250, %289 : vector<2x256xf32>
    %c16_i32_48 = arith.constant 16 : i32
    %291 = tpu.dynamic_rotate %41 by %c16_i32_48 dim 1 : vector<2x256xf32>, i32 -> vector<2x256xf32>
    %292 = arith.andi %61, %101 : vector<1x256xi1>
    %cst_49 = arith.constant 0.000000e+00 : f32
    %293 = vector.shape_cast %292 : vector<1x256xi1> to vector<1x256xi1>
    %294 = vector.broadcast %293 : vector<1x256xi1> to vector<2x256xi1>
    %295 = vector.broadcast %cst_49 : f32 to vector<2x256xf32>
    %296 = arith.select %294, %291, %295 : vector<2x256xi1>, vector<2x256xf32>
    %297 = vector.extract_strided_slice %42 {offsets = [0, 17], sizes = [2, 1], strides = [1, 1]} : vector<2x49xf32> to vector<2x1xf32>
    %298 = vector.broadcast %297 : vector<2x1xf32> to vector<2x256xf32>
    %299 = arith.mulf %298, %296 : vector<2x256xf32>
    %300 = arith.addf %260, %299 : vector<2x256xf32>
    %c15_i32_50 = arith.constant 15 : i32
    %301 = tpu.dynamic_rotate %41 by %c15_i32_50 dim 1 : vector<2x256xf32>, i32 -> vector<2x256xf32>
    %302 = arith.andi %61, %106 : vector<1x256xi1>
    %cst_51 = arith.constant 0.000000e+00 : f32
    %303 = vector.shape_cast %302 : vector<1x256xi1> to vector<1x256xi1>
    %304 = vector.broadcast %303 : vector<1x256xi1> to vector<2x256xi1>
    %305 = vector.broadcast %cst_51 : f32 to vector<2x256xf32>
    %306 = arith.select %304, %301, %305 : vector<2x256xi1>, vector<2x256xf32>
    %307 = vector.extract_strided_slice %42 {offsets = [0, 18], sizes = [2, 1], strides = [1, 1]} : vector<2x49xf32> to vector<2x1xf32>
    %308 = vector.broadcast %307 : vector<2x1xf32> to vector<2x256xf32>
    %309 = arith.mulf %308, %306 : vector<2x256xf32>
    %310 = arith.addf %270, %309 : vector<2x256xf32>
    %c14_i32_52 = arith.constant 14 : i32
    %311 = tpu.dynamic_rotate %41 by %c14_i32_52 dim 1 : vector<2x256xf32>, i32 -> vector<2x256xf32>
    %312 = arith.andi %61, %111 : vector<1x256xi1>
    %cst_53 = arith.constant 0.000000e+00 : f32
    %313 = vector.shape_cast %312 : vector<1x256xi1> to vector<1x256xi1>
    %314 = vector.broadcast %313 : vector<1x256xi1> to vector<2x256xi1>
    %315 = vector.broadcast %cst_53 : f32 to vector<2x256xf32>
    %316 = arith.select %314, %311, %315 : vector<2x256xi1>, vector<2x256xf32>
    %317 = vector.extract_strided_slice %42 {offsets = [0, 19], sizes = [2, 1], strides = [1, 1]} : vector<2x49xf32> to vector<2x1xf32>
    %318 = vector.broadcast %317 : vector<2x1xf32> to vector<2x256xf32>
    %319 = arith.mulf %318, %316 : vector<2x256xf32>
    %320 = arith.addf %280, %319 : vector<2x256xf32>
    %c13_i32_54 = arith.constant 13 : i32
    %321 = tpu.dynamic_rotate %41 by %c13_i32_54 dim 1 : vector<2x256xf32>, i32 -> vector<2x256xf32>
    %322 = arith.andi %61, %116 : vector<1x256xi1>
    %cst_55 = arith.constant 0.000000e+00 : f32
    %323 = vector.shape_cast %322 : vector<1x256xi1> to vector<1x256xi1>
    %324 = vector.broadcast %323 : vector<1x256xi1> to vector<2x256xi1>
    %325 = vector.broadcast %cst_55 : f32 to vector<2x256xf32>
    %326 = arith.select %324, %321, %325 : vector<2x256xi1>, vector<2x256xf32>
    %327 = vector.extract_strided_slice %42 {offsets = [0, 20], sizes = [2, 1], strides = [1, 1]} : vector<2x49xf32> to vector<2x1xf32>
    %328 = vector.broadcast %327 : vector<2x1xf32> to vector<2x256xf32>
    %329 = arith.mulf %328, %326 : vector<2x256xf32>
    %330 = arith.addf %290, %329 : vector<2x256xf32>
    %c3_i32_56 = arith.constant 3 : i32
    %331 = tpu.dynamic_rotate %41 by %c3_i32_56 dim 1 : vector<2x256xf32>, i32 -> vector<2x256xf32>
    %332 = arith.andi %66, %86 : vector<1x256xi1>
    %cst_57 = arith.constant 0.000000e+00 : f32
    %333 = vector.shape_cast %332 : vector<1x256xi1> to vector<1x256xi1>
    %334 = vector.broadcast %333 : vector<1x256xi1> to vector<2x256xi1>
    %335 = vector.broadcast %cst_57 : f32 to vector<2x256xf32>
    %336 = arith.select %334, %331, %335 : vector<2x256xi1>, vector<2x256xf32>
    %337 = vector.extract_strided_slice %42 {offsets = [0, 21], sizes = [2, 1], strides = [1, 1]} : vector<2x49xf32> to vector<2x1xf32>
    %338 = vector.broadcast %337 : vector<2x1xf32> to vector<2x256xf32>
    %339 = arith.mulf %338, %336 : vector<2x256xf32>
    %340 = arith.addf %300, %339 : vector<2x256xf32>
    %c2_i32_58 = arith.constant 2 : i32
    %341 = tpu.dynamic_rotate %41 by %c2_i32_58 dim 1 : vector<2x256xf32>, i32 -> vector<2x256xf32>
    %342 = arith.andi %66, %91 : vector<1x256xi1>
    %cst_59 = arith.constant 0.000000e+00 : f32
    %343 = vector.shape_cast %342 : vector<1x256xi1> to vector<1x256xi1>
    %344 = vector.broadcast %343 : vector<1x256xi1> to vector<2x256xi1>
    %345 = vector.broadcast %cst_59 : f32 to vector<2x256xf32>
    %346 = arith.select %344, %341, %345 : vector<2x256xi1>, vector<2x256xf32>
    %347 = vector.extract_strided_slice %42 {offsets = [0, 22], sizes = [2, 1], strides = [1, 1]} : vector<2x49xf32> to vector<2x1xf32>
    %348 = vector.broadcast %347 : vector<2x1xf32> to vector<2x256xf32>
    %349 = arith.mulf %348, %346 : vector<2x256xf32>
    %350 = arith.addf %310, %349 : vector<2x256xf32>
    %c1_i32_60 = arith.constant 1 : i32
    %351 = tpu.dynamic_rotate %41 by %c1_i32_60 dim 1 : vector<2x256xf32>, i32 -> vector<2x256xf32>
    %352 = arith.andi %66, %96 : vector<1x256xi1>
    %cst_61 = arith.constant 0.000000e+00 : f32
    %353 = vector.shape_cast %352 : vector<1x256xi1> to vector<1x256xi1>
    %354 = vector.broadcast %353 : vector<1x256xi1> to vector<2x256xi1>
    %355 = vector.broadcast %cst_61 : f32 to vector<2x256xf32>
    %356 = arith.select %354, %351, %355 : vector<2x256xi1>, vector<2x256xf32>
    %357 = vector.extract_strided_slice %42 {offsets = [0, 23], sizes = [2, 1], strides = [1, 1]} : vector<2x49xf32> to vector<2x1xf32>
    %358 = vector.broadcast %357 : vector<2x1xf32> to vector<2x256xf32>
    %359 = arith.mulf %358, %356 : vector<2x256xf32>
    %360 = arith.addf %320, %359 : vector<2x256xf32>
    %361 = vector.extract_strided_slice %42 {offsets = [0, 24], sizes = [2, 1], strides = [1, 1]} : vector<2x49xf32> to vector<2x1xf32>
    %362 = vector.broadcast %361 : vector<2x1xf32> to vector<2x256xf32>
    %363 = arith.mulf %362, %41 : vector<2x256xf32>
    %364 = arith.addf %330, %363 : vector<2x256xf32>
    %c255_i32 = arith.constant 255 : i32
    %365 = tpu.dynamic_rotate %41 by %c255_i32 dim 1 : vector<2x256xf32>, i32 -> vector<2x256xf32>
    %366 = arith.andi %66, %106 : vector<1x256xi1>
    %cst_62 = arith.constant 0.000000e+00 : f32
    %367 = vector.shape_cast %366 : vector<1x256xi1> to vector<1x256xi1>
    %368 = vector.broadcast %367 : vector<1x256xi1> to vector<2x256xi1>
    %369 = vector.broadcast %cst_62 : f32 to vector<2x256xf32>
    %370 = arith.select %368, %365, %369 : vector<2x256xi1>, vector<2x256xf32>
    %371 = vector.extract_strided_slice %42 {offsets = [0, 25], sizes = [2, 1], strides = [1, 1]} : vector<2x49xf32> to vector<2x1xf32>
    %372 = vector.broadcast %371 : vector<2x1xf32> to vector<2x256xf32>
    %373 = arith.mulf %372, %370 : vector<2x256xf32>
    %374 = arith.addf %340, %373 : vector<2x256xf32>
    %c254_i32 = arith.constant 254 : i32
    %375 = tpu.dynamic_rotate %41 by %c254_i32 dim 1 : vector<2x256xf32>, i32 -> vector<2x256xf32>
    %376 = arith.andi %66, %111 : vector<1x256xi1>
    %cst_63 = arith.constant 0.000000e+00 : f32
    %377 = vector.shape_cast %376 : vector<1x256xi1> to vector<1x256xi1>
    %378 = vector.broadcast %377 : vector<1x256xi1> to vector<2x256xi1>
    %379 = vector.broadcast %cst_63 : f32 to vector<2x256xf32>
    %380 = arith.select %378, %375, %379 : vector<2x256xi1>, vector<2x256xf32>
    %381 = vector.extract_strided_slice %42 {offsets = [0, 26], sizes = [2, 1], strides = [1, 1]} : vector<2x49xf32> to vector<2x1xf32>
    %382 = vector.broadcast %381 : vector<2x1xf32> to vector<2x256xf32>
    %383 = arith.mulf %382, %380 : vector<2x256xf32>
    %384 = arith.addf %350, %383 : vector<2x256xf32>
    %c253_i32 = arith.constant 253 : i32
    %385 = tpu.dynamic_rotate %41 by %c253_i32 dim 1 : vector<2x256xf32>, i32 -> vector<2x256xf32>
    %386 = arith.andi %66, %116 : vector<1x256xi1>
    %cst_64 = arith.constant 0.000000e+00 : f32
    %387 = vector.shape_cast %386 : vector<1x256xi1> to vector<1x256xi1>
    %388 = vector.broadcast %387 : vector<1x256xi1> to vector<2x256xi1>
    %389 = vector.broadcast %cst_64 : f32 to vector<2x256xf32>
    %390 = arith.select %388, %385, %389 : vector<2x256xi1>, vector<2x256xf32>
    %391 = vector.extract_strided_slice %42 {offsets = [0, 27], sizes = [2, 1], strides = [1, 1]} : vector<2x49xf32> to vector<2x1xf32>
    %392 = vector.broadcast %391 : vector<2x1xf32> to vector<2x256xf32>
    %393 = arith.mulf %392, %390 : vector<2x256xf32>
    %394 = arith.addf %360, %393 : vector<2x256xf32>
    %c243_i32 = arith.constant 243 : i32
    %395 = tpu.dynamic_rotate %41 by %c243_i32 dim 1 : vector<2x256xf32>, i32 -> vector<2x256xf32>
    %396 = arith.andi %71, %86 : vector<1x256xi1>
    %cst_65 = arith.constant 0.000000e+00 : f32
    %397 = vector.shape_cast %396 : vector<1x256xi1> to vector<1x256xi1>
    %398 = vector.broadcast %397 : vector<1x256xi1> to vector<2x256xi1>
    %399 = vector.broadcast %cst_65 : f32 to vector<2x256xf32>
    %400 = arith.select %398, %395, %399 : vector<2x256xi1>, vector<2x256xf32>
    %401 = vector.extract_strided_slice %42 {offsets = [0, 28], sizes = [2, 1], strides = [1, 1]} : vector<2x49xf32> to vector<2x1xf32>
    %402 = vector.broadcast %401 : vector<2x1xf32> to vector<2x256xf32>
    %403 = arith.mulf %402, %400 : vector<2x256xf32>
    %404 = arith.addf %364, %403 : vector<2x256xf32>
    %c242_i32 = arith.constant 242 : i32
    %405 = tpu.dynamic_rotate %41 by %c242_i32 dim 1 : vector<2x256xf32>, i32 -> vector<2x256xf32>
    %406 = arith.andi %71, %91 : vector<1x256xi1>
    %cst_66 = arith.constant 0.000000e+00 : f32
    %407 = vector.shape_cast %406 : vector<1x256xi1> to vector<1x256xi1>
    %408 = vector.broadcast %407 : vector<1x256xi1> to vector<2x256xi1>
    %409 = vector.broadcast %cst_66 : f32 to vector<2x256xf32>
    %410 = arith.select %408, %405, %409 : vector<2x256xi1>, vector<2x256xf32>
    %411 = vector.extract_strided_slice %42 {offsets = [0, 29], sizes = [2, 1], strides = [1, 1]} : vector<2x49xf32> to vector<2x1xf32>
    %412 = vector.broadcast %411 : vector<2x1xf32> to vector<2x256xf32>
    %413 = arith.mulf %412, %410 : vector<2x256xf32>
    %414 = arith.addf %374, %413 : vector<2x256xf32>
    %c241_i32 = arith.constant 241 : i32
    %415 = tpu.dynamic_rotate %41 by %c241_i32 dim 1 : vector<2x256xf32>, i32 -> vector<2x256xf32>
    %416 = arith.andi %71, %96 : vector<1x256xi1>
    %cst_67 = arith.constant 0.000000e+00 : f32
    %417 = vector.shape_cast %416 : vector<1x256xi1> to vector<1x256xi1>
    %418 = vector.broadcast %417 : vector<1x256xi1> to vector<2x256xi1>
    %419 = vector.broadcast %cst_67 : f32 to vector<2x256xf32>
    %420 = arith.select %418, %415, %419 : vector<2x256xi1>, vector<2x256xf32>
    %421 = vector.extract_strided_slice %42 {offsets = [0, 30], sizes = [2, 1], strides = [1, 1]} : vector<2x49xf32> to vector<2x1xf32>
    %422 = vector.broadcast %421 : vector<2x1xf32> to vector<2x256xf32>
    %423 = arith.mulf %422, %420 : vector<2x256xf32>
    %424 = arith.addf %384, %423 : vector<2x256xf32>
    %c240_i32_68 = arith.constant 240 : i32
    %425 = tpu.dynamic_rotate %41 by %c240_i32_68 dim 1 : vector<2x256xf32>, i32 -> vector<2x256xf32>
    %426 = arith.andi %71, %101 : vector<1x256xi1>
    %cst_69 = arith.constant 0.000000e+00 : f32
    %427 = vector.shape_cast %426 : vector<1x256xi1> to vector<1x256xi1>
    %428 = vector.broadcast %427 : vector<1x256xi1> to vector<2x256xi1>
    %429 = vector.broadcast %cst_69 : f32 to vector<2x256xf32>
    %430 = arith.select %428, %425, %429 : vector<2x256xi1>, vector<2x256xf32>
    %431 = vector.extract_strided_slice %42 {offsets = [0, 31], sizes = [2, 1], strides = [1, 1]} : vector<2x49xf32> to vector<2x1xf32>
    %432 = vector.broadcast %431 : vector<2x1xf32> to vector<2x256xf32>
    %433 = arith.mulf %432, %430 : vector<2x256xf32>
    %434 = arith.addf %394, %433 : vector<2x256xf32>
    %c239_i32 = arith.constant 239 : i32
    %435 = tpu.dynamic_rotate %41 by %c239_i32 dim 1 : vector<2x256xf32>, i32 -> vector<2x256xf32>
    %436 = arith.andi %71, %106 : vector<1x256xi1>
    %cst_70 = arith.constant 0.000000e+00 : f32
    %437 = vector.shape_cast %436 : vector<1x256xi1> to vector<1x256xi1>
    %438 = vector.broadcast %437 : vector<1x256xi1> to vector<2x256xi1>
    %439 = vector.broadcast %cst_70 : f32 to vector<2x256xf32>
    %440 = arith.select %438, %435, %439 : vector<2x256xi1>, vector<2x256xf32>
    %441 = vector.extract_strided_slice %42 {offsets = [0, 32], sizes = [2, 1], strides = [1, 1]} : vector<2x49xf32> to vector<2x1xf32>
    %442 = vector.broadcast %441 : vector<2x1xf32> to vector<2x256xf32>
    %443 = arith.mulf %442, %440 : vector<2x256xf32>
    %444 = arith.addf %404, %443 : vector<2x256xf32>
    %c238_i32 = arith.constant 238 : i32
    %445 = tpu.dynamic_rotate %41 by %c238_i32 dim 1 : vector<2x256xf32>, i32 -> vector<2x256xf32>
    %446 = arith.andi %71, %111 : vector<1x256xi1>
    %cst_71 = arith.constant 0.000000e+00 : f32
    %447 = vector.shape_cast %446 : vector<1x256xi1> to vector<1x256xi1>
    %448 = vector.broadcast %447 : vector<1x256xi1> to vector<2x256xi1>
    %449 = vector.broadcast %cst_71 : f32 to vector<2x256xf32>
    %450 = arith.select %448, %445, %449 : vector<2x256xi1>, vector<2x256xf32>
    %451 = vector.extract_strided_slice %42 {offsets = [0, 33], sizes = [2, 1], strides = [1, 1]} : vector<2x49xf32> to vector<2x1xf32>
    %452 = vector.broadcast %451 : vector<2x1xf32> to vector<2x256xf32>
    %453 = arith.mulf %452, %450 : vector<2x256xf32>
    %454 = arith.addf %414, %453 : vector<2x256xf32>
    %c237_i32 = arith.constant 237 : i32
    %455 = tpu.dynamic_rotate %41 by %c237_i32 dim 1 : vector<2x256xf32>, i32 -> vector<2x256xf32>
    %456 = arith.andi %71, %116 : vector<1x256xi1>
    %cst_72 = arith.constant 0.000000e+00 : f32
    %457 = vector.shape_cast %456 : vector<1x256xi1> to vector<1x256xi1>
    %458 = vector.broadcast %457 : vector<1x256xi1> to vector<2x256xi1>
    %459 = vector.broadcast %cst_72 : f32 to vector<2x256xf32>
    %460 = arith.select %458, %455, %459 : vector<2x256xi1>, vector<2x256xf32>
    %461 = vector.extract_strided_slice %42 {offsets = [0, 34], sizes = [2, 1], strides = [1, 1]} : vector<2x49xf32> to vector<2x1xf32>
    %462 = vector.broadcast %461 : vector<2x1xf32> to vector<2x256xf32>
    %463 = arith.mulf %462, %460 : vector<2x256xf32>
    %464 = arith.addf %424, %463 : vector<2x256xf32>
    %c227_i32 = arith.constant 227 : i32
    %465 = tpu.dynamic_rotate %41 by %c227_i32 dim 1 : vector<2x256xf32>, i32 -> vector<2x256xf32>
    %466 = arith.andi %76, %86 : vector<1x256xi1>
    %cst_73 = arith.constant 0.000000e+00 : f32
    %467 = vector.shape_cast %466 : vector<1x256xi1> to vector<1x256xi1>
    %468 = vector.broadcast %467 : vector<1x256xi1> to vector<2x256xi1>
    %469 = vector.broadcast %cst_73 : f32 to vector<2x256xf32>
    %470 = arith.select %468, %465, %469 : vector<2x256xi1>, vector<2x256xf32>
    %471 = vector.extract_strided_slice %42 {offsets = [0, 35], sizes = [2, 1], strides = [1, 1]} : vector<2x49xf32> to vector<2x1xf32>
    %472 = vector.broadcast %471 : vector<2x1xf32> to vector<2x256xf32>
    %473 = arith.mulf %472, %470 : vector<2x256xf32>
    %474 = arith.addf %434, %473 : vector<2x256xf32>
    %c226_i32 = arith.constant 226 : i32
    %475 = tpu.dynamic_rotate %41 by %c226_i32 dim 1 : vector<2x256xf32>, i32 -> vector<2x256xf32>
    %476 = arith.andi %76, %91 : vector<1x256xi1>
    %cst_74 = arith.constant 0.000000e+00 : f32
    %477 = vector.shape_cast %476 : vector<1x256xi1> to vector<1x256xi1>
    %478 = vector.broadcast %477 : vector<1x256xi1> to vector<2x256xi1>
    %479 = vector.broadcast %cst_74 : f32 to vector<2x256xf32>
    %480 = arith.select %478, %475, %479 : vector<2x256xi1>, vector<2x256xf32>
    %481 = vector.extract_strided_slice %42 {offsets = [0, 36], sizes = [2, 1], strides = [1, 1]} : vector<2x49xf32> to vector<2x1xf32>
    %482 = vector.broadcast %481 : vector<2x1xf32> to vector<2x256xf32>
    %483 = arith.mulf %482, %480 : vector<2x256xf32>
    %484 = arith.addf %444, %483 : vector<2x256xf32>
    %c225_i32 = arith.constant 225 : i32
    %485 = tpu.dynamic_rotate %41 by %c225_i32 dim 1 : vector<2x256xf32>, i32 -> vector<2x256xf32>
    %486 = arith.andi %76, %96 : vector<1x256xi1>
    %cst_75 = arith.constant 0.000000e+00 : f32
    %487 = vector.shape_cast %486 : vector<1x256xi1> to vector<1x256xi1>
    %488 = vector.broadcast %487 : vector<1x256xi1> to vector<2x256xi1>
    %489 = vector.broadcast %cst_75 : f32 to vector<2x256xf32>
    %490 = arith.select %488, %485, %489 : vector<2x256xi1>, vector<2x256xf32>
    %491 = vector.extract_strided_slice %42 {offsets = [0, 37], sizes = [2, 1], strides = [1, 1]} : vector<2x49xf32> to vector<2x1xf32>
    %492 = vector.broadcast %491 : vector<2x1xf32> to vector<2x256xf32>
    %493 = arith.mulf %492, %490 : vector<2x256xf32>
    %494 = arith.addf %454, %493 : vector<2x256xf32>
    %c224_i32_76 = arith.constant 224 : i32
    %495 = tpu.dynamic_rotate %41 by %c224_i32_76 dim 1 : vector<2x256xf32>, i32 -> vector<2x256xf32>
    %496 = arith.andi %76, %101 : vector<1x256xi1>
    %cst_77 = arith.constant 0.000000e+00 : f32
    %497 = vector.shape_cast %496 : vector<1x256xi1> to vector<1x256xi1>
    %498 = vector.broadcast %497 : vector<1x256xi1> to vector<2x256xi1>
    %499 = vector.broadcast %cst_77 : f32 to vector<2x256xf32>
    %500 = arith.select %498, %495, %499 : vector<2x256xi1>, vector<2x256xf32>
    %501 = vector.extract_strided_slice %42 {offsets = [0, 38], sizes = [2, 1], strides = [1, 1]} : vector<2x49xf32> to vector<2x1xf32>
    %502 = vector.broadcast %501 : vector<2x1xf32> to vector<2x256xf32>
    %503 = arith.mulf %502, %500 : vector<2x256xf32>
    %504 = arith.addf %464, %503 : vector<2x256xf32>
    %c223_i32 = arith.constant 223 : i32
    %505 = tpu.dynamic_rotate %41 by %c223_i32 dim 1 : vector<2x256xf32>, i32 -> vector<2x256xf32>
    %506 = arith.andi %76, %106 : vector<1x256xi1>
    %cst_78 = arith.constant 0.000000e+00 : f32
    %507 = vector.shape_cast %506 : vector<1x256xi1> to vector<1x256xi1>
    %508 = vector.broadcast %507 : vector<1x256xi1> to vector<2x256xi1>
    %509 = vector.broadcast %cst_78 : f32 to vector<2x256xf32>
    %510 = arith.select %508, %505, %509 : vector<2x256xi1>, vector<2x256xf32>
    %511 = vector.extract_strided_slice %42 {offsets = [0, 39], sizes = [2, 1], strides = [1, 1]} : vector<2x49xf32> to vector<2x1xf32>
    %512 = vector.broadcast %511 : vector<2x1xf32> to vector<2x256xf32>
    %513 = arith.mulf %512, %510 : vector<2x256xf32>
    %514 = arith.addf %474, %513 : vector<2x256xf32>
    %c222_i32 = arith.constant 222 : i32
    %515 = tpu.dynamic_rotate %41 by %c222_i32 dim 1 : vector<2x256xf32>, i32 -> vector<2x256xf32>
    %516 = arith.andi %76, %111 : vector<1x256xi1>
    %cst_79 = arith.constant 0.000000e+00 : f32
    %517 = vector.shape_cast %516 : vector<1x256xi1> to vector<1x256xi1>
    %518 = vector.broadcast %517 : vector<1x256xi1> to vector<2x256xi1>
    %519 = vector.broadcast %cst_79 : f32 to vector<2x256xf32>
    %520 = arith.select %518, %515, %519 : vector<2x256xi1>, vector<2x256xf32>
    %521 = vector.extract_strided_slice %42 {offsets = [0, 40], sizes = [2, 1], strides = [1, 1]} : vector<2x49xf32> to vector<2x1xf32>
    %522 = vector.broadcast %521 : vector<2x1xf32> to vector<2x256xf32>
    %523 = arith.mulf %522, %520 : vector<2x256xf32>
    %524 = arith.addf %484, %523 : vector<2x256xf32>
    %c221_i32 = arith.constant 221 : i32
    %525 = tpu.dynamic_rotate %41 by %c221_i32 dim 1 : vector<2x256xf32>, i32 -> vector<2x256xf32>
    %526 = arith.andi %76, %116 : vector<1x256xi1>
    %cst_80 = arith.constant 0.000000e+00 : f32
    %527 = vector.shape_cast %526 : vector<1x256xi1> to vector<1x256xi1>
    %528 = vector.broadcast %527 : vector<1x256xi1> to vector<2x256xi1>
    %529 = vector.broadcast %cst_80 : f32 to vector<2x256xf32>
    %530 = arith.select %528, %525, %529 : vector<2x256xi1>, vector<2x256xf32>
    %531 = vector.extract_strided_slice %42 {offsets = [0, 41], sizes = [2, 1], strides = [1, 1]} : vector<2x49xf32> to vector<2x1xf32>
    %532 = vector.broadcast %531 : vector<2x1xf32> to vector<2x256xf32>
    %533 = arith.mulf %532, %530 : vector<2x256xf32>
    %534 = arith.addf %494, %533 : vector<2x256xf32>
    %c211_i32 = arith.constant 211 : i32
    %535 = tpu.dynamic_rotate %41 by %c211_i32 dim 1 : vector<2x256xf32>, i32 -> vector<2x256xf32>
    %536 = arith.andi %81, %86 : vector<1x256xi1>
    %cst_81 = arith.constant 0.000000e+00 : f32
    %537 = vector.shape_cast %536 : vector<1x256xi1> to vector<1x256xi1>
    %538 = vector.broadcast %537 : vector<1x256xi1> to vector<2x256xi1>
    %539 = vector.broadcast %cst_81 : f32 to vector<2x256xf32>
    %540 = arith.select %538, %535, %539 : vector<2x256xi1>, vector<2x256xf32>
    %541 = vector.extract_strided_slice %42 {offsets = [0, 42], sizes = [2, 1], strides = [1, 1]} : vector<2x49xf32> to vector<2x1xf32>
    %542 = vector.broadcast %541 : vector<2x1xf32> to vector<2x256xf32>
    %543 = arith.mulf %542, %540 : vector<2x256xf32>
    %544 = arith.addf %504, %543 : vector<2x256xf32>
    %c210_i32 = arith.constant 210 : i32
    %545 = tpu.dynamic_rotate %41 by %c210_i32 dim 1 : vector<2x256xf32>, i32 -> vector<2x256xf32>
    %546 = arith.andi %81, %91 : vector<1x256xi1>
    %cst_82 = arith.constant 0.000000e+00 : f32
    %547 = vector.shape_cast %546 : vector<1x256xi1> to vector<1x256xi1>
    %548 = vector.broadcast %547 : vector<1x256xi1> to vector<2x256xi1>
    %549 = vector.broadcast %cst_82 : f32 to vector<2x256xf32>
    %550 = arith.select %548, %545, %549 : vector<2x256xi1>, vector<2x256xf32>
    %551 = vector.extract_strided_slice %42 {offsets = [0, 43], sizes = [2, 1], strides = [1, 1]} : vector<2x49xf32> to vector<2x1xf32>
    %552 = vector.broadcast %551 : vector<2x1xf32> to vector<2x256xf32>
    %553 = arith.mulf %552, %550 : vector<2x256xf32>
    %554 = arith.addf %514, %553 : vector<2x256xf32>
    %c209_i32 = arith.constant 209 : i32
    %555 = tpu.dynamic_rotate %41 by %c209_i32 dim 1 : vector<2x256xf32>, i32 -> vector<2x256xf32>
    %556 = arith.andi %81, %96 : vector<1x256xi1>
    %cst_83 = arith.constant 0.000000e+00 : f32
    %557 = vector.shape_cast %556 : vector<1x256xi1> to vector<1x256xi1>
    %558 = vector.broadcast %557 : vector<1x256xi1> to vector<2x256xi1>
    %559 = vector.broadcast %cst_83 : f32 to vector<2x256xf32>
    %560 = arith.select %558, %555, %559 : vector<2x256xi1>, vector<2x256xf32>
    %561 = vector.extract_strided_slice %42 {offsets = [0, 44], sizes = [2, 1], strides = [1, 1]} : vector<2x49xf32> to vector<2x1xf32>
    %562 = vector.broadcast %561 : vector<2x1xf32> to vector<2x256xf32>
    %563 = arith.mulf %562, %560 : vector<2x256xf32>
    %564 = arith.addf %524, %563 : vector<2x256xf32>
    %c208_i32_84 = arith.constant 208 : i32
    %565 = tpu.dynamic_rotate %41 by %c208_i32_84 dim 1 : vector<2x256xf32>, i32 -> vector<2x256xf32>
    %566 = arith.andi %81, %101 : vector<1x256xi1>
    %cst_85 = arith.constant 0.000000e+00 : f32
    %567 = vector.shape_cast %566 : vector<1x256xi1> to vector<1x256xi1>
    %568 = vector.broadcast %567 : vector<1x256xi1> to vector<2x256xi1>
    %569 = vector.broadcast %cst_85 : f32 to vector<2x256xf32>
    %570 = arith.select %568, %565, %569 : vector<2x256xi1>, vector<2x256xf32>
    %571 = vector.extract_strided_slice %42 {offsets = [0, 45], sizes = [2, 1], strides = [1, 1]} : vector<2x49xf32> to vector<2x1xf32>
    %572 = vector.broadcast %571 : vector<2x1xf32> to vector<2x256xf32>
    %573 = arith.mulf %572, %570 : vector<2x256xf32>
    %574 = arith.addf %534, %573 : vector<2x256xf32>
    %c207_i32 = arith.constant 207 : i32
    %575 = tpu.dynamic_rotate %41 by %c207_i32 dim 1 : vector<2x256xf32>, i32 -> vector<2x256xf32>
    %576 = arith.andi %81, %106 : vector<1x256xi1>
    %cst_86 = arith.constant 0.000000e+00 : f32
    %577 = vector.shape_cast %576 : vector<1x256xi1> to vector<1x256xi1>
    %578 = vector.broadcast %577 : vector<1x256xi1> to vector<2x256xi1>
    %579 = vector.broadcast %cst_86 : f32 to vector<2x256xf32>
    %580 = arith.select %578, %575, %579 : vector<2x256xi1>, vector<2x256xf32>
    %581 = vector.extract_strided_slice %42 {offsets = [0, 46], sizes = [2, 1], strides = [1, 1]} : vector<2x49xf32> to vector<2x1xf32>
    %582 = vector.broadcast %581 : vector<2x1xf32> to vector<2x256xf32>
    %583 = arith.mulf %582, %580 : vector<2x256xf32>
    %584 = arith.addf %544, %583 : vector<2x256xf32>
    %c206_i32 = arith.constant 206 : i32
    %585 = tpu.dynamic_rotate %41 by %c206_i32 dim 1 : vector<2x256xf32>, i32 -> vector<2x256xf32>
    %586 = arith.andi %81, %111 : vector<1x256xi1>
    %cst_87 = arith.constant 0.000000e+00 : f32
    %587 = vector.shape_cast %586 : vector<1x256xi1> to vector<1x256xi1>
    %588 = vector.broadcast %587 : vector<1x256xi1> to vector<2x256xi1>
    %589 = vector.broadcast %cst_87 : f32 to vector<2x256xf32>
    %590 = arith.select %588, %585, %589 : vector<2x256xi1>, vector<2x256xf32>
    %591 = vector.extract_strided_slice %42 {offsets = [0, 47], sizes = [2, 1], strides = [1, 1]} : vector<2x49xf32> to vector<2x1xf32>
    %592 = vector.broadcast %591 : vector<2x1xf32> to vector<2x256xf32>
    %593 = arith.mulf %592, %590 : vector<2x256xf32>
    %594 = arith.addf %554, %593 : vector<2x256xf32>
    %c205_i32 = arith.constant 205 : i32
    %595 = tpu.dynamic_rotate %41 by %c205_i32 dim 1 : vector<2x256xf32>, i32 -> vector<2x256xf32>
    %596 = arith.andi %81, %116 : vector<1x256xi1>
    %cst_88 = arith.constant 0.000000e+00 : f32
    %597 = vector.shape_cast %596 : vector<1x256xi1> to vector<1x256xi1>
    %598 = vector.broadcast %597 : vector<1x256xi1> to vector<2x256xi1>
    %599 = vector.broadcast %cst_88 : f32 to vector<2x256xf32>
    %600 = arith.select %598, %595, %599 : vector<2x256xi1>, vector<2x256xf32>
    %601 = vector.extract_strided_slice %42 {offsets = [0, 48], sizes = [2, 1], strides = [1, 1]} : vector<2x49xf32> to vector<2x1xf32>
    %602 = vector.broadcast %601 : vector<2x1xf32> to vector<2x256xf32>
    %603 = arith.mulf %602, %600 : vector<2x256xf32>
    %604 = arith.addf %564, %603 : vector<2x256xf32>
    %605 = arith.addf %604, %574 : vector<2x256xf32>
    %606 = arith.addf %584, %594 : vector<2x256xf32>
    %607 = arith.addf %605, %606 : vector<2x256xf32>
    %608 = vector.extract_strided_slice %607 {offsets = [0, 0], sizes = [1, 256], strides = [1, 1]} : vector<2x256xf32> to vector<1x256xf32>
    %609 = vector.extract_strided_slice %607 {offsets = [1, 0], sizes = [1, 256], strides = [1, 1]} : vector<2x256xf32> to vector<1x256xf32>
    %610 = arith.addf %608, %609 : vector<1x256xf32>
    %611 = vector.broadcast %43 : f32 to vector<1x256xf32>
    %612 = arith.addf %610, %611 : vector<1x256xf32>
    %613 = arith.negf %612 : vector<1x256xf32>
    %614 = math.exp %613 : vector<1x256xf32>
    %cst_89 = arith.constant 1.000000e+00 : f32
    %615 = vector.broadcast %cst_89 : f32 to vector<1x256xf32>
    %616 = arith.addf %615, %614 : vector<1x256xf32>
    %617 = arith.divf %615, %616 : vector<1x256xf32>
    %618 = vector.shape_cast %617 : vector<1x256xf32> to vector<1x1x256xf32>
    %619 = vector.broadcast %618 : vector<1x1x256xf32> to vector<1x32x256xf32>
    %620 = arith.mulf %36, %619 : vector<1x32x256xf32>
    %c0_90 = arith.constant 0 : index
    %c0_91 = arith.constant 0 : index
    %c0_92 = arith.constant 0 : index
    %621 = vector.load %arg6[%c0_90, %c0_91, %c0_92] : memref<1x32x256xf32, #tpu.memory_space<vmem>>, vector<1x32x256xf32>
    tpu.vector_store %arg6[%c0_90, %c0_91, %c0_92], %620 {strides = array<i32>} : memref<1x32x256xf32, #tpu.memory_space<vmem>>, vector<1x32x256xf32>,
    return
  }
  func.func @transform_0(%arg0: i32) -> (i32, i32, i32) {
    %c0_i32 = arith.constant 0 : i32
    %c0_i32_0 = arith.constant 0 : i32
    %c0_i32_1 = arith.constant 0 : i32
    return %arg0, %c0_i32, %c0_i32_0 : i32, i32, i32
  }
  func.func @transform_1(%arg0: i32) -> (i32, i32) {
    %c0_i32 = arith.constant 0 : i32
    %c0_i32_0 = arith.constant 0 : i32
    %c0_i32_1 = arith.constant 0 : i32
    return %c0_i32, %c0_i32_0 : i32, i32
  }
  func.func @transform_2(%arg0: i32) -> (i32, i32) {
    %c0_i32 = arith.constant 0 : i32
    %c0_i32_0 = arith.constant 0 : i32
    %c0_i32_1 = arith.constant 0 : i32
    return %c0_i32, %c0_i32_0 : i32, i32
  }
  func.func @transform_3(%arg0: i32) -> (i32, i32) {
    %c0_i32 = arith.constant 0 : i32
    %c0_i32_0 = arith.constant 0 : i32
    %c0_i32_1 = arith.constant 0 : i32
    return %c0_i32, %c0_i32_0 : i32, i32
  }
  func.func @transform_4(%arg0: i32) -> i32 {
    %c0_i32 = arith.constant 0 : i32
    %c0_i32_0 = arith.constant 0 : i32
    return %c0_i32 : i32
  }
  func.func @transform_5(%arg0: i32) -> (i32, i32, i32) {
    %c0_i32 = arith.constant 0 : i32
    %c0_i32_0 = arith.constant 0 : i32
    %c0_i32_1 = arith.constant 0 : i32
    return %arg0, %c0_i32, %c0_i32_0 : i32, i32, i32
  }
}

</mosaic_0001>

<llo_original>
// kernel: tpu_custom_call.1
$region0: #{tpu_custom_call.1}
  #allocation0 [shape = 'u32[]', space=smem, size = 0x4, offset = 0x4, fixed_abs, tag = 'smem constant byte address 0x4 - core index']
  #allocation1 [shape = 'u32[144,128]{1,0:T(1,128)}', space=vmem, size = 0x12000, scoped, tag = 'internal scratch']
  #allocation2 [shape = 'f32[1]{0:T(128)S(6)}', space=smem, size = 0x200, scoped, tag = 'scoped memory for tpu_custom_call.1']
  %s0 = inlined_call_operand.hbm [shape: f32[2,32,256], index: 0, kind: input, shape index: {}]
  %s1 = inlined_call_operand.vmem [shape: f32[2,32], index: 1, kind: input, shape index: {}]
  %s2 = inlined_call_operand.vmem [shape: f32[32,2], index: 2, kind: input, shape index: {}]
  %s3 = inlined_call_operand.vmem [shape: f32[2,49], index: 3, kind: input, shape index: {}]
  %s4 = inlined_call_operand.<no memory space> [shape: f32[1], index: 4, kind: input, shape index: {}]
  %s5 = inlined_call_operand.hbm [shape: f32[2,32,256], index: 5, kind: output, shape index: {}]
  %s6 = sld [smem:[#allocation0]]
  $region57: #{tpu_custom_call.1} parent=0
    _
  %s8 = ssub.s32 1, %s6
  %s9 = scalar_select 0, %s8, %s6
  %10 = sst [smem:[#allocation2]] %s4
  $region1: #{tpu_custom_call.1} parent=0
    #allocation3 [shape = 'u8[65536]{0}', space=vmem, size = 0x10000, scoped, tag = 'input window, operand 0']
    #allocation4 [shape = 's32[2]{0}', space=sflag, size = 0x8, scoped, tag = 'scoped memory for tpu_custom_call.1']
    #allocation5 [shape = 's32[2]{0}', space=sflag, size = 0x8, scoped, tag = 'scoped memory for tpu_custom_call.1']
    #allocation6 [shape = 'u8[65536]{0}', space=vmem, size = 0x10000, scoped, tag = 'output window, operand 0']
    %11 = vsyncpa [#allocation4], 0
    %s12 = scalar_lea.sflag [#allocation4], 1
    %13 = vsyncpa %s12, 0
    %14 = vsyncpa [#allocation5], 0
    %s15 = scalar_lea.sflag [#allocation5], 1
    %16 = vsyncpa %s15, 0
    loop: start=0, step=1, limit=4
    $region2: #{tpu_custom_call.1} parent=1 // loop_pre_header
      _
    $region3: #{tpu_custom_call.1} parent=1 // loop_header
      %s18 = sphi 0, %s22
      %p19 = scmp.ge.s32.totalorder %s18, 4
      %s28 = sphi 0, %s30
      %s31 = sphi 0, %s28
      %s32 = sphi 0, %s31
      %s48 = sphi 0, %s32
      %s52 = sphi 0, %s52
      %s54 = sphi 0, %s52
      %s55 = sphi 0, %s54
      %s69 = sphi 0, %s55
      %s73 = sphi 0, %s73
      %s75 = sphi 0, %s73
      %s76 = sphi 0, %s75
      %s90 = sphi 0, %s76
      %s94 = sphi 0, %s94
      %s96 = sphi 0, %s94
      %s97 = sphi 0, %s96
      %s111 = sphi 0, %s97
      %s115 = sphi 0, %s115
      %s117 = sphi 0, %s115
      %s118 = sphi 0, %s117
      %s132 = sphi 0, %s118
      %s138 = sphi 0, %s140
      %s141 = sphi 0, %s138
      %s142 = sphi 0, %s141
      %s158 = sphi 0, %s142
    $region4: #{tpu_custom_call.1} parent=1 // loop_header_branch
      %21 = sbr.rel (%p19) target = $region8
    $region5: #{tpu_custom_call.1} parent=1 // loop_body
      %s23 = ssub.s32 %s18, 1
      %s24 = ssub.s32 %s18, 2
      %s25 = sadd.s32 %s18, 1
      %s26 = ssub.s32 %s18, %s25
      %p27 = scmp.eq.s32.totalorder %s26, 0
      %s29 = sadd.s32 %s28, 1
      %s30 = scalar_select %p27, %s28, %s29
      %p33 = pneg %p27
      %p34 = scmp.eq.s32.totalorder %s18, 1
      %p35 = por %p33, %p34
      %p36 = scmp.ne.s32.totalorder %s28, %s31
      %p37 = scmp.eq.s32.totalorder %s18, 0
      %p38 = por %p36, %p37
      %p39 = scmp.ne.s32.totalorder %s28, %s31
      %p40 = scmp.eq.s32.totalorder %s23, 1
      %p41 = por %p39, %p40
      %p42 = scmp.ne.s32.totalorder %s31, %s32
      %p43 = scmp.eq.s32.totalorder %s23, 0
      %p44 = por %p42, %p43
      %p45 = scmp.ne.s32.totalorder %s31, %s32
      %p46 = scmp.eq.s32.totalorder %s24, 1
      %p47 = por %p45, %p46
      %p49 = scmp.ne.s32.totalorder %s32, %s48
      %p50 = scmp.eq.s32.totalorder %s24, 0
      %p51 = por %p49, %p50
      %s53 = sadd.s32 %s52, 1
      %p56 = scmp.eq.s32.totalorder %s18, 1
      %p57 = scmp.ne.s32.totalorder %s52, %s54
      %p58 = scmp.eq.s32.totalorder %s18, 0
      %p59 = por %p57, %p58
      %p60 = scmp.ne.s32.totalorder %s52, %s54
      %p61 = scmp.eq.s32.totalorder %s23, 1
      %p62 = por %p60, %p61
      %p63 = scmp.ne.s32.totalorder %s54, %s55
      %p64 = scmp.eq.s32.totalorder %s23, 0
      %p65 = por %p63, %p64
      %p66 = scmp.ne.s32.totalorder %s54, %s55
      %p67 = scmp.eq.s32.totalorder %s24, 1
      %p68 = por %p66, %p67
      %p70 = scmp.ne.s32.totalorder %s55, %s69
      %p71 = scmp.eq.s32.totalorder %s24, 0
      %p72 = por %p70, %p71
      %s74 = sadd.s32 %s73, 1
      %p77 = scmp.eq.s32.totalorder %s18, 1
      %p78 = scmp.ne.s32.totalorder %s73, %s75
      %p79 = scmp.eq.s32.totalorder %s18, 0
      %p80 = por %p78, %p79
      %p81 = scmp.ne.s32.totalorder %s73, %s75
      %p82 = scmp.eq.s32.totalorder %s23, 1
      %p83 = por %p81, %p82
      %p84 = scmp.ne.s32.totalorder %s75, %s76
      %p85 = scmp.eq.s32.totalorder %s23, 0
      %p86 = por %p84, %p85
      %p87 = scmp.ne.s32.totalorder %s75, %s76
      %p88 = scmp.eq.s32.totalorder %s24, 1
      %p89 = por %p87, %p88
      %p91 = scmp.ne.s32.totalorder %s76, %s90
      %p92 = scmp.eq.s32.totalorder %s24, 0
      %p93 = por %p91, %p92
      %s95 = sadd.s32 %s94, 1
      %p98 = scmp.eq.s32.totalorder %s18, 1
      %p99 = scmp.ne.s32.totalorder %s94, %s96
      %p100 = scmp.eq.s32.totalorder %s18, 0
      %p101 = por %p99, %p100
      %p102 = scmp.ne.s32.totalorder %s94, %s96
      %p103 = scmp.eq.s32.totalorder %s23, 1
      %p104 = por %p102, %p103
      %p105 = scmp.ne.s32.totalorder %s96, %s97
      %p106 = scmp.eq.s32.totalorder %s23, 0
      %p107 = por %p105, %p106
      %p108 = scmp.ne.s32.totalorder %s96, %s97
      %p109 = scmp.eq.s32.totalorder %s24, 1
      %p110 = por %p108, %p109
      %p112 = scmp.ne.s32.totalorder %s97, %s111
      %p113 = scmp.eq.s32.totalorder %s24, 0
      %p114 = por %p112, %p113
      %s116 = sadd.s32 %s115, 1
      %p119 = scmp.eq.s32.totalorder %s18, 1
      %p120 = scmp.ne.s32.totalorder %s115, %s117
      %p121 = scmp.eq.s32.totalorder %s18, 0
      %p122 = por %p120, %p121
      %p123 = scmp.ne.s32.totalorder %s115, %s117
      %p124 = scmp.eq.s32.totalorder %s23, 1
      %p125 = por %p123, %p124
      %p126 = scmp.ne.s32.totalorder %s117, %s118
      %p127 = scmp.eq.s32.totalorder %s23, 0
      %p128 = por %p126, %p127
      %p129 = scmp.ne.s32.totalorder %s117, %s118
      %p130 = scmp.eq.s32.totalorder %s24, 1
      %p131 = por %p129, %p130
      %p133 = scmp.ne.s32.totalorder %s118, %s132
      %p134 = scmp.eq.s32.totalorder %s24, 0
      %p135 = por %p133, %p134
      %s136 = ssub.s32 %s18, %s25
      %p137 = scmp.eq.s32.totalorder %s136, 0
      %s139 = sadd.s32 %s138, 1
      %s140 = scalar_select %p137, %s138, %s139
      %p143 = pneg %p137
      %p144 = scmp.eq.s32.totalorder %s18, 1
      %p145 = por %p143, %p144
      %p146 = scmp.ne.s32.totalorder %s138, %s141
      %p147 = scmp.eq.s32.totalorder %s18, 0
      %p148 = por %p146, %p147
      %p149 = scmp.ne.s32.totalorder %s138, %s141
      %p150 = scmp.eq.s32.totalorder %s23, 1
      %p151 = por %p149, %p150
      %p152 = scmp.ne.s32.totalorder %s141, %s142
      %p153 = scmp.eq.s32.totalorder %s23, 0
      %p154 = por %p152, %p153
      %p155 = scmp.ne.s32.totalorder %s141, %s142
      %p156 = scmp.eq.s32.totalorder %s24, 1
      %p157 = por %p155, %p156
      %p159 = scmp.ne.s32.totalorder %s142, %s158
      %p160 = scmp.eq.s32.totalorder %s24, 0
      %p161 = por %p159, %p160
      %p162 = scmp.le.s32.totalorder 1, %s18
      %p163 = scmp.lt.s32.totalorder %s18, 3
      %p164 = pnand %p162, %p163
      %p165 = pneg %p164
      // Predicated region
      $region9: #{tpu_custom_call.1} parent=5 // pred_check
        _
      $region10: #{tpu_custom_call.1} parent=5 // pred_check_branch
        %167 = sbr.rel (%p164) target = $region12
      $region11: #{tpu_custom_call.1} parent=5 // pred_region
        %s168 = ssub.s32 %s18, 1
        // Predicated region
        $region13: #{tpu_custom_call.1} parent=11 // pred_check
          %p169 = pneg %p65
        $region14: #{tpu_custom_call.1} parent=11 // pred_check_branch
          %171 = sbr.rel (%p169) target = $region16
        $region15: #{tpu_custom_call.1} parent=11 // pred_region
          _
        $region16: #{tpu_custom_call.1} parent=11 // pred_fallthru
          _
        // Predicated region
        $region17: #{tpu_custom_call.1} parent=11 // pred_check
          %p172 = pneg %p86
        $region18: #{tpu_custom_call.1} parent=11 // pred_check_branch
          %174 = sbr.rel (%p172) target = $region20
        $region19: #{tpu_custom_call.1} parent=11 // pred_region
          _
        $region20: #{tpu_custom_call.1} parent=11 // pred_fallthru
          _
        // Predicated region
        $region21: #{tpu_custom_call.1} parent=11 // pred_check
          %p175 = pneg %p107
        $region22: #{tpu_custom_call.1} parent=11 // pred_check_branch
          %177 = sbr.rel (%p175) target = $region24
        $region23: #{tpu_custom_call.1} parent=11 // pred_region
          _
        $region24: #{tpu_custom_call.1} parent=11 // pred_fallthru
          _
        // Predicated region
        $region25: #{tpu_custom_call.1} parent=11 // pred_check
          %p178 = pneg %p128
        $region26: #{tpu_custom_call.1} parent=11 // pred_check_branch
          %180 = sbr.rel (%p178) target = $region28
        $region27: #{tpu_custom_call.1} parent=11 // pred_region
          _
        $region28: #{tpu_custom_call.1} parent=11 // pred_fallthru
          _
      $region12: #{tpu_custom_call.1} parent=5 // pred_fallthru
        _
      %p181 = scmp.lt.s32.totalorder %s18, 2
      // Predicated region
      $region29: #{tpu_custom_call.1} parent=5 // pred_check
        %p182 = pneg %p181
      $region30: #{tpu_custom_call.1} parent=5 // pred_check_branch
        %184 = sbr.rel (%p182) target = $region32
      $region31: #{tpu_custom_call.1} parent=5 // pred_region
        // Predicated region
        $region33: #{tpu_custom_call.1} parent=31 // pred_check
          %p185 = pneg %p38
        $region34: #{tpu_custom_call.1} parent=31 // pred_check_branch
          %187 = sbr.rel (%p185) target = $region36
        $region35: #{tpu_custom_call.1} parent=31 // pred_region
          %s188 = sand.u32 %s28, 1
          %s189 = scalar_lea.sflag [#allocation4], %s188
          %s190 = sand.u32 %s28, 1
          %s191 = smul.addr %s190, 64
          %s192 = scalar_lea.vmem [#allocation3], %s191
          %s194 = ssub.s32 1024, 1024
          %195 = vsyncadd %s189, %s194
          %s196 = smul.addr %s18, 8
          %s197 = smul.addr %s196, 128
          %s198 = scalar_lea.hbm %s0, %s197
          %s199 = sshll.u32 %s192, 4
          %s200 = int_to_ptr.vmem [resolvable:$true] %s199
          %205 = dma.hbm_to_vmem [thread:$0]  %s198, 1024, %s200, %s189, 256, 256, 16
        $region36: #{tpu_custom_call.1} parent=31 // pred_fallthru
          _
      $region32: #{tpu_custom_call.1} parent=5 // pred_fallthru
        _
      %p206 = scmp.le.s32.totalorder 1, %s18
      %p207 = scmp.lt.s32.totalorder %s18, 3
      %p208 = pnand %p206, %p207
      %p209 = pneg %p208
      // Predicated region
      $region37: #{tpu_custom_call.1} parent=5 // pred_check
        _
      $region38: #{tpu_custom_call.1} parent=5 // pred_check_branch
        %211 = sbr.rel (%p208) target = $region40
      $region39: #{tpu_custom_call.1} parent=5 // pred_region
        %s212 = ssub.s32 %s18, 1
        %s213 = sand.u32 %s31, 1
        %s214 = scalar_lea.sflag [#allocation4], %s213
        %s215 = sand.u32 %s31, 1
        %s216 = smul.addr %s215, 64
        %s217 = scalar_lea.vmem [#allocation3], %s216
        // Predicated region
        $region41: #{tpu_custom_call.1} parent=39 // pred_check
          %p218 = pneg %p44
        $region42: #{tpu_custom_call.1} parent=39 // pred_check_branch
          %220 = sbr.rel (%p218) target = $region44
        $region43: #{tpu_custom_call.1} parent=39 // pred_region
          %221 = dma.done %s214, 1024
        $region44: #{tpu_custom_call.1} parent=39 // pred_fallthru
          _
        %s222 = sand.u32 %s31, 1
        %s223 = scalar_lea.sflag [#allocation4], %s222
        %s224 = sand.u32 %s31, 1
        %s225 = smul.addr %s224, 64
        %s226 = scalar_lea.vmem [#allocation3], %s225
        %p227 = pneg %p44
        %p228 = pneg %p41
        %p229 = pneg %p65
        %p230 = pneg %p62
        %p231 = pneg %p86
        %p232 = pneg %p83
        %p233 = pneg %p107
        %p234 = pneg %p104
        %p235 = pneg %p128
        %p236 = pneg %p125
        %p237 = pneg %p154
        %p238 = pneg %p151
        %s239 = sand.u32 %s141, 1
        %s240 = scalar_lea.sflag [#allocation5], %s239
        %s241 = sand.u32 %s141, 1
        %s242 = smul.addr %s241, 64
        %s243 = scalar_lea.vmem [#allocation6], %s242
        %v244 = vld [vmem:[%s217] sm:$0xff]
        %v245 = vld [vmem:[%s217 + $0x8] sm:$0xff]
        %v246 = vld [vmem:[%s217 + $0x10] sm:$0xff]
        %v247 = vld [vmem:[%s217 + $0x18] sm:$0xff]
        %v248 = vld [vmem:[%s217 + $0x20] sm:$0xff]
        %v249 = vld [vmem:[%s217 + $0x28] sm:$0xff]
        %v250 = vld [vmem:[%s217 + $0x30] sm:$0xff]
        %v251 = vld [vmem:[%s217 + $0x38] sm:$0xff]
        %v252 = vadd.f32 %v244, %v245
        %253 = vadd.xlane.f32.xlu0 %v252
        %v254 = vpop.xlane.xlu0 %253
        %v255 = vadd.f32 %v246, %v247
        %256 = vadd.xlane.f32.xlu0 %v255
        %v257 = vpop.xlane.xlu0 %256
        %v258 = vadd.f32 %v248, %v249
        %259 = vadd.xlane.f32.xlu0 %v258
        %v260 = vpop.xlane.xlu0 %259
        %v261 = vadd.f32 %v250, %v251
        %262 = vadd.xlane.f32.xlu0 %v261
        %v263 = vpop.xlane.xlu0 %262
        %v264 = vmul.f32 %v254, 0.00390625
        %v265 = vmul.f32 %v257, 0.00390625
        %v266 = vmul.f32 %v260, 0.00390625
        %v267 = vmul.f32 %v263, 0.00390625
        %v268 = vsub.f32 %v244, %v264
        %v269 = vsub.f32 %v245, %v264
        %v270 = vsub.f32 %v246, %v265
        %v271 = vsub.f32 %v247, %v265
        %v272 = vsub.f32 %v248, %v266
        %v273 = vsub.f32 %v249, %v266
        %v274 = vsub.f32 %v250, %v267
        %v275 = vsub.f32 %v251, %v267
        %v276 = vmul.f32 %v268, %v268
        %v277 = vmul.f32 %v269, %v269
        %v278 = vmul.f32 %v270, %v270
        %v279 = vmul.f32 %v271, %v271
        %v280 = vmul.f32 %v272, %v272
        %v281 = vmul.f32 %v273, %v273
        %v282 = vmul.f32 %v274, %v274
        %v283 = vmul.f32 %v275, %v275
        %v284 = vadd.f32 %v276, %v277
        %285 = vadd.xlane.f32.xlu0 %v284
        %v286 = vpop.xlane.xlu0 %285
        %v287 = vadd.f32 %v278, %v279
        %288 = vadd.xlane.f32.xlu0 %v287
        %v289 = vpop.xlane.xlu0 %288
        %v290 = vadd.f32 %v280, %v281
        %291 = vadd.xlane.f32.xlu0 %v290
        %v292 = vpop.xlane.xlu0 %291
        %v293 = vadd.f32 %v282, %v283
        %294 = vadd.xlane.f32.xlu0 %v293
        %v295 = vpop.xlane.xlu0 %294
        %v296 = vmul.f32 %v286, 0.00390625
        %v297 = vmul.f32 %v289, 0.00390625
        %v298 = vmul.f32 %v292, 0.00390625
        %v299 = vmul.f32 %v295, 0.00390625
        %v300 = vrsqrt.pop %v296
        %v301 = vmul.f32 %v296, %v300
        %vm302 = vcmp.eq.f32.partialorder %v296, inf
        %v303 = vsel %vm302, %v296, %v301
        %vm304 = vcmp.eq.f32.partialorder %v296, 0.0
        %v305 = vand.u32 %v296, 2147483648
        %v306 = vsel %vm304, %v305, %v303
        %v307 = vrsqrt.pop %v297
        %v308 = vmul.f32 %v297, %v307
        %vm309 = vcmp.eq.f32.partialorder %v297, inf
        %v310 = vsel %vm309, %v297, %v308
        %vm311 = vcmp.eq.f32.partialorder %v297, 0.0
        %v312 = vand.u32 %v297, 2147483648
        %v313 = vsel %vm311, %v312, %v310
        %v314 = vrsqrt.pop %v298
        %v315 = vmul.f32 %v298, %v314
        %vm316 = vcmp.eq.f32.partialorder %v298, inf
        %v317 = vsel %vm316, %v298, %v315
        %vm318 = vcmp.eq.f32.partialorder %v298, 0.0
        %v319 = vand.u32 %v298, 2147483648
        %v320 = vsel %vm318, %v319, %v317
        %v321 = vrsqrt.pop %v299
        %v322 = vmul.f32 %v299, %v321
        %vm323 = vcmp.eq.f32.partialorder %v299, inf
        %v324 = vsel %vm323, %v299, %v322
        %vm325 = vcmp.eq.f32.partialorder %v299, 0.0
        %v326 = vand.u32 %v299, 2147483648
        %v327 = vsel %vm325, %v326, %v324
        %v328 = vadd.f32 %v264, %v306
        %v329 = vadd.f32 %v265, %v313
        %v330 = vadd.f32 %v266, %v320
        %v331 = vadd.f32 %v267, %v327
        %v332 = vld [vmem:[%s1] sm:$0x3]
        %v333 = vld [vmem:[%s2] sm:$0xff]
        %v334 = vld [vmem:[%s2 + $0x8] sm:$0xff]
        %v335 = vld [vmem:[%s2 + $0x10] sm:$0xff]
        %v336 = vld [vmem:[%s2 + $0x18] sm:$0xff]
        %v341 = vlaneseq
        %v342 = vand.u32 %v341, 127
        %v343 = vlaneseq
        %v344 = vshrl.u32 %v343, 7
        %v345 = vsub.s32 %v342, %v344
        %v346 = vrot.slane %v328, %v345
        %v347 = vadd.s32 %v342, 4294967288
        %v348 = vlaneseq
        %v349 = vshrl.u32 %v348, 7
        %v350 = vsub.s32 %v347, %v349
        %v351 = vrot.slane %v329, %v350
        %vm352 = vcmask 130112
        %v353 = vsel %vm352, %v351, %v346
        %v354 = vadd.s32 %v342, 4294967280
        %v355 = vlaneseq
        %v356 = vshrl.u32 %v355, 7
        %v357 = vsub.s32 %v354, %v356
        %v358 = vrot.slane %v330, %v357
        %vm359 = vcmask 195712
        %v360 = vsel %vm359, %v358, %v353
        %v361 = vadd.s32 %v342, 4294967272
        %v362 = vlaneseq
        %v363 = vshrl.u32 %v362, 7
        %v364 = vsub.s32 %v361, %v363
        %v365 = vrot.slane %v331, %v364
        %vm366 = vcmask 261312
        %v367 = vsel %vm366, %v365, %v360
        %v369 = vmul.f32 %v332, %v367
        %vm370 = vcmask 254976
        %v371 = vsel %vm370, %v369, 0.0
        %372 = vadd.xlane.f32.xlu0 %v371
        %v373 = vpop.xlane.xlu0 %372
        %v374 = vmax.f32 %v373, 0.0
        %v376 = vlaneseq
        %v377 = vshrl.u32 %v376, 7
        %v378 = vsub.s32 %v342, %v377
        %v379 = vrot.slane %v374, %v378
        %vm380 = vcmask 1042434
        %v381 = vsel %vm380, %v379, %v379
        %vm382 = vcmask 1043459
        %v383 = vsel %vm382, %v379, %v381
        %vm384 = vcmask 1044484
        %v385 = vsel %vm384, %v379, %v383
        %vm386 = vcmask 1045509
        %v387 = vsel %vm386, %v379, %v385
        %vm388 = vcmask 1046534
        %v389 = vsel %vm388, %v379, %v387
        %vm390 = vcmask 1047559
        %v391 = vsel %vm390, %v379, %v389
        %v393 = vmul.f32 %v333, %v391
        %v394 = vmul.f32 %v334, %v391
        %v395 = vmul.f32 %v335, %v391
        %v396 = vmul.f32 %v336, %v391
        %vm397 = vcmask 15360
        %v398 = vsel %vm397, %v393, 0.0
        %399 = vadd.xlane.f32.xlu0 %v398
        %v400 = vpop.xlane.xlu0 %399
        %v401 = vsel %vm397, %v394, 0.0
        %402 = vadd.xlane.f32.xlu0 %v401
        %v403 = vpop.xlane.xlu0 %402
        %v404 = vsel %vm397, %v395, 0.0
        %405 = vadd.xlane.f32.xlu0 %v404
        %v406 = vpop.xlane.xlu0 %405
        %v407 = vsel %vm397, %v396, 0.0
        %408 = vadd.xlane.f32.xlu0 %v407
        %v409 = vpop.xlane.xlu0 %408
        %v410 = vxor.u32 %v400, 2147483648
        %v411 = vxor.u32 %v403, 2147483648
        %v412 = vxor.u32 %v406, 2147483648
        %v413 = vxor.u32 %v409, 2147483648
        %v414 = vmul.f32 %v410, 1.442695
        %v415 = vpow.pop %v414
        %v416 = vmul.f32 %v411, 1.442695
        %v417 = vpow.pop %v416
        %v418 = vmul.f32 %v412, 1.442695
        %v419 = vpow.pop %v418
        %v420 = vmul.f32 %v413, 1.442695
        %v421 = vpow.pop %v420
        %v422 = vadd.f32 %v415, 1.0
        %v423 = vadd.f32 %v417, 1.0
        %v424 = vadd.f32 %v419, 1.0
        %v425 = vadd.f32 %v421, 1.0
        %v426 = vrcp.pop %v422
        %v427 = vmul.f32 1.0, %v426
        %v428 = vrcp.pop %v423
        %v429 = vmul.f32 1.0, %v428
        %v430 = vrcp.pop %v424
        %v431 = vmul.f32 1.0, %v430
        %v432 = vrcp.pop %v425
        %v433 = vmul.f32 1.0, %v432
        %v434 = vmul.f32 %v244, %v427
        %v435 = vmul.f32 %v245, %v427
        %v436 = vmul.f32 %v246, %v429
        %v437 = vmul.f32 %v247, %v429
        %v438 = vmul.f32 %v248, %v431
        %v439 = vmul.f32 %v249, %v431
        %v440 = vmul.f32 %v250, %v433
        %v441 = vmul.f32 %v251, %v433
        %v442 = vmax.f32 %v434, %v438
        %v443 = vmax.f32 %v436, %v440
        %v444 = vmax.f32 %v442, %v443
        %v445 = vrot.slane %v444, 4
        %v446 = vmax.f32 %v444, %v445
        %v447 = vrot.slane %v446, 2
        %v448 = vmax.f32 %v446, %v447
        %v449 = vrot.slane %v448, 1
        %v450 = vmax.f32 %v448, %v449
        %v451 = vmax.f32 %v435, %v439
        %v452 = vmax.f32 %v437, %v441
        %v453 = vmax.f32 %v451, %v452
        %v454 = vrot.slane %v453, 4
        %v455 = vmax.f32 %v453, %v454
        %v456 = vrot.slane %v455, 2
        %v457 = vmax.f32 %v455, %v456
        %v458 = vrot.slane %v457, 1
        %v459 = vmax.f32 %v457, %v458
        %v460 = vadd.f32 %v434, %v436
        %v461 = vadd.f32 %v460, %v438
        %v462 = vadd.f32 %v461, %v440
        %v463 = vrot.slane %v462, 4
        %v464 = vadd.f32 %v462, %v463
        %v465 = vrot.slane %v464, 2
        %v466 = vadd.f32 %v464, %v465
        %v467 = vrot.slane %v466, 1
        %v468 = vadd.f32 %v466, %v467
        %v469 = vadd.f32 %v435, %v437
        %v470 = vadd.f32 %v469, %v439
        %v471 = vadd.f32 %v470, %v441
        %v472 = vrot.slane %v471, 4
        %v473 = vadd.f32 %v471, %v472
        %v474 = vrot.slane %v473, 2
        %v475 = vadd.f32 %v473, %v474
        %v476 = vrot.slane %v475, 1
        %v477 = vadd.f32 %v475, %v476
        %v478 = vmul.f32 %v468, 0.03125
        %v479 = vmul.f32 %v477, 0.03125
        %vm480 = vcmask 1040384
        %v481 = vsel %vm480, %v450, %v478
        %v482 = vsel %vm480, %v459, %v479
        %v483 = vld [vmem:[%s3] sm:$0x3]
        %s484 = sld [smem:[#allocation2]]
        %v485 = vadd.s32 %v342, 128
        %v486 = vand.u32 %v342, 15
        %v487 = vand.u32 %v485, 15
        %vm488 = vcmp.ge.s32.totalorder %v342, 48
        %vm489 = vcmp.ge.s32.totalorder %v485, 48
        %vm490 = vcmp.lt.s32.totalorder %v342, 304
        %vm491 = vcmp.lt.s32.totalorder %v485, 304
        %vm492 = vmand %vm488, %vm490
        %vm493 = vmand %vm489, %vm491
        %vm494 = vcmp.ge.s32.totalorder %v342, 32
        %vm495 = vcmp.ge.s32.totalorder %v485, 32
        %vm496 = vcmp.lt.s32.totalorder %v342, 288
        %vm497 = vcmp.lt.s32.totalorder %v485, 288
        %vm498 = vmand %vm494, %vm496
        %vm499 = vmand %vm495, %vm497
        %vm500 = vcmp.ge.s32.totalorder %v342, 16
        %vm501 = vcmp.ge.s32.totalorder %v485, 16
        %vm502 = vcmp.lt.s32.totalorder %v342, 272
        %vm503 = vcmp.lt.s32.totalorder %v485, 272
        %vm504 = vmand %vm500, %vm502
        %vm505 = vmand %vm501, %vm503
        %vm506 = vcmp.ge.s32.totalorder %v342, 0
        %vm507 = vcmp.ge.s32.totalorder %v485, 0
        %vm508 = vcmp.lt.s32.totalorder %v342, 256
        %vm509 = vcmp.lt.s32.totalorder %v485, 256
        %vm510 = vmand %vm506, %vm508
        %vm511 = vmand %vm507, %vm509
        %vm512 = vcmp.ge.s32.totalorder %v342, 4294967280
        %vm513 = vcmp.ge.s32.totalorder %v485, 4294967280
        %vm514 = vcmp.lt.s32.totalorder %v342, 240
        %vm515 = vcmp.lt.s32.totalorder %v485, 240
        %vm516 = vmand %vm512, %vm514
        %vm517 = vmand %vm513, %vm515
        %vm518 = vcmp.ge.s32.totalorder %v342, 4294967264
        %vm519 = vcmp.ge.s32.totalorder %v485, 4294967264
        %vm520 = vcmp.lt.s32.totalorder %v342, 224
        %vm521 = vcmp.lt.s32.totalorder %v485, 224
        %vm522 = vmand %vm518, %vm520
        %vm523 = vmand %vm519, %vm521
        %vm524 = vcmp.ge.s32.totalorder %v342, 4294967248
        %vm525 = vcmp.ge.s32.totalorder %v485, 4294967248
        %vm526 = vcmp.lt.s32.totalorder %v342, 208
        %vm527 = vcmp.lt.s32.totalorder %v485, 208
        %vm528 = vmand %vm524, %vm526
        %vm529 = vmand %vm525, %vm527
        %vm530 = vcmp.ge.s32.totalorder %v486, 3
        %vm531 = vcmp.ge.s32.totalorder %v487, 3
        %vm532 = vcmp.lt.s32.totalorder %v486, 19
        %vm533 = vcmp.lt.s32.totalorder %v487, 19
        %vm534 = vmand %vm530, %vm532
        %vm535 = vmand %vm531, %vm533
        %vm536 = vcmp.ge.s32.totalorder %v486, 2
        %vm537 = vcmp.ge.s32.totalorder %v487, 2
        %vm538 = vcmp.lt.s32.totalorder %v486, 18
        %vm539 = vcmp.lt.s32.totalorder %v487, 18
        %vm540 = vmand %vm536, %vm538
        %vm541 = vmand %vm537, %vm539
        %vm542 = vcmp.ge.s32.totalorder %v486, 1
        %vm543 = vcmp.ge.s32.totalorder %v487, 1
        %vm544 = vcmp.lt.s32.totalorder %v486, 17
        %vm545 = vcmp.lt.s32.totalorder %v487, 17
        %vm546 = vmand %vm542, %vm544
        %vm547 = vmand %vm543, %vm545
        %vm548 = vcmp.ge.s32.totalorder %v486, 0
        %vm549 = vcmp.ge.s32.totalorder %v487, 0
        %vm550 = vcmp.lt.s32.totalorder %v486, 16
        %vm551 = vcmp.lt.s32.totalorder %v487, 16
        %vm552 = vmand %vm548, %vm550
        %vm553 = vmand %vm549, %vm551
        %vm554 = vcmp.ge.s32.totalorder %v486, 4294967295
        %vm555 = vcmp.ge.s32.totalorder %v487, 4294967295
        %vm556 = vcmp.lt.s32.totalorder %v486, 15
        %vm557 = vcmp.lt.s32.totalorder %v487, 15
        %vm558 = vmand %vm554, %vm556
        %vm559 = vmand %vm555, %vm557
        %vm560 = vcmp.ge.s32.totalorder %v486, 4294967294
        %vm561 = vcmp.ge.s32.totalorder %v487, 4294967294
        %vm562 = vcmp.lt.s32.totalorder %v486, 14
        %vm563 = vcmp.lt.s32.totalorder %v487, 14
        %vm564 = vmand %vm560, %vm562
        %vm565 = vmand %vm561, %vm563
        %vm566 = vcmp.ge.s32.totalorder %v486, 4294967293
        %vm567 = vcmp.ge.s32.totalorder %v487, 4294967293
        %vm568 = vcmp.lt.s32.totalorder %v486, 13
        %vm569 = vcmp.lt.s32.totalorder %v487, 13
        %vm570 = vmand %vm566, %vm568
        %vm571 = vmand %vm567, %vm569
        %572 = vrot.lane.b32.xlu0 %v481, 51
        %v573 = vpop.permute.xlu0 %572
        %574 = vrot.lane.b32.xlu0 %v482, 51
        %v575 = vpop.permute.xlu0 %574
        %vm576 = vcmp.lt.s32.totalorder %v342, 51
        %v577 = vsel %vm576, %v573, %v575
        %v578 = vsel %vm576, %v575, %v573
        %vm579 = vmand %vm492, %vm534
        %vm580 = vmand %vm493, %vm535
        %v581 = vsel %vm579, 1, 0
        %v582 = vsel %vm580, 1, 0
        %vm583 = vcmp.eq.s32.totalorder %v581, 1
        %vm584 = vcmp.eq.s32.totalorder %v582, 1
        %v585 = vsel %vm583, %v578, 0.0
        %v586 = vsel %vm584, %v577, 0.0
        %588 = vset.pattern.permute.xlu0 0
        %589 = vperm.xlu0 %588, %v483
        %v590 = vpop.permute.xlu0 %589
        %v592 = vmul.f32 %v590, %v585
        %v593 = vmul.f32 %v590, %v586
        %v594 = vadd.f32 %v592, 0.0
        %v595 = vadd.f32 %v593, 0.0
        %596 = vrot.lane.b32.xlu0 %v481, 50
        %v597 = vpop.permute.xlu0 %596
        %598 = vrot.lane.b32.xlu0 %v482, 50
        %v599 = vpop.permute.xlu0 %598
        %vm600 = vcmp.lt.s32.totalorder %v342, 50
        %v601 = vsel %vm600, %v597, %v599
        %v602 = vsel %vm600, %v599, %v597
        %vm603 = vmand %vm492, %vm540
        %vm604 = vmand %vm493, %vm541
        %v605 = vsel %vm603, 1, 0
        %v606 = vsel %vm604, 1, 0
        %vm607 = vcmp.eq.s32.totalorder %v605, 1
        %vm608 = vcmp.eq.s32.totalorder %v606, 1
        %v609 = vsel %vm607, %v602, 0.0
        %v610 = vsel %vm608, %v601, 0.0
        %611 = vset.pattern.permute.xlu0 1
        %612 = vperm.xlu0 %611, %v483
        %v613 = vpop.permute.xlu0 %612
        %v615 = vmul.f32 %v613, %v609
        %v616 = vmul.f32 %v613, %v610
        %v617 = vadd.f32 %v615, 0.0
        %v618 = vadd.f32 %v616, 0.0
        %619 = vrot.lane.b32.xlu0 %v481, 49
        %v620 = vpop.permute.xlu0 %619
        %621 = vrot.lane.b32.xlu0 %v482, 49
        %v622 = vpop.permute.xlu0 %621
        %vm623 = vcmp.lt.s32.totalorder %v342, 49
        %v624 = vsel %vm623, %v620, %v622
        %v625 = vsel %vm623, %v622, %v620
        %vm626 = vmand %vm492, %vm546
        %vm627 = vmand %vm493, %vm547
        %v628 = vsel %vm626, 1, 0
        %v629 = vsel %vm627, 1, 0
        %vm630 = vcmp.eq.s32.totalorder %v628, 1
        %vm631 = vcmp.eq.s32.totalorder %v629, 1
        %v632 = vsel %vm630, %v625, 0.0
        %v633 = vsel %vm631, %v624, 0.0
        %634 = vset.pattern.permute.xlu0 2
        %635 = vperm.xlu0 %634, %v483
        %v636 = vpop.permute.xlu0 %635
        %v638 = vmul.f32 %v636, %v632
        %v639 = vmul.f32 %v636, %v633
        %v640 = vadd.f32 %v638, 0.0
        %v641 = vadd.f32 %v639, 0.0
        %642 = vrot.lane.b32.xlu0 %v481, 48
        %v643 = vpop.permute.xlu0 %642
        %644 = vrot.lane.b32.xlu0 %v482, 48
        %v645 = vpop.permute.xlu0 %644
        %vm646 = vcmp.lt.s32.totalorder %v342, 48
        %v647 = vsel %vm646, %v643, %v645
        %v648 = vsel %vm646, %v645, %v643
        %vm649 = vmand %vm492, %vm552
        %vm650 = vmand %vm493, %vm553
        %v651 = vsel %vm649, 1, 0
        %v652 = vsel %vm650, 1, 0
        %vm653 = vcmp.eq.s32.totalorder %v651, 1
        %vm654 = vcmp.eq.s32.totalorder %v652, 1
        %v655 = vsel %vm653, %v648, 0.0
        %v656 = vsel %vm654, %v647, 0.0
        %657 = vset.pattern.permute.xlu0 3
        %658 = vperm.xlu0 %657, %v483
        %v659 = vpop.permute.xlu0 %658
        %v661 = vmul.f32 %v659, %v655
        %v662 = vmul.f32 %v659, %v656
        %v663 = vadd.f32 %v661, 0.0
        %v664 = vadd.f32 %v662, 0.0
        %665 = vrot.lane.b32.xlu0 %v481, 47
        %v666 = vpop.permute.xlu0 %665
        %667 = vrot.lane.b32.xlu0 %v482, 47
        %v668 = vpop.permute.xlu0 %667
        %vm669 = vcmp.lt.s32.totalorder %v342, 47
        %v670 = vsel %vm669, %v666, %v668
        %v671 = vsel %vm669, %v668, %v666
        %vm672 = vmand %vm492, %vm558
        %vm673 = vmand %vm493, %vm559
        %v674 = vsel %vm672, 1, 0
        %v675 = vsel %vm673, 1, 0
        %vm676 = vcmp.eq.s32.totalorder %v674, 1
        %vm677 = vcmp.eq.s32.totalorder %v675, 1
        %v678 = vsel %vm676, %v671, 0.0
        %v679 = vsel %vm677, %v670, 0.0
        %680 = vset.pattern.permute.xlu0 4
        %681 = vperm.xlu0 %680, %v483
        %v682 = vpop.permute.xlu0 %681
        %v684 = vmul.f32 %v682, %v678
        %v685 = vmul.f32 %v682, %v679
        %v686 = vadd.f32 %v594, %v684
        %v687 = vadd.f32 %v595, %v685
        %688 = vrot.lane.b32.xlu0 %v481, 46
        %v689 = vpop.permute.xlu0 %688
        %690 = vrot.lane.b32.xlu0 %v482, 46
        %v691 = vpop.permute.xlu0 %690
        %vm692 = vcmp.lt.s32.totalorder %v342, 46
        %v693 = vsel %vm692, %v689, %v691
        %v694 = vsel %vm692, %v691, %v689
        %vm695 = vmand %vm492, %vm564
        %vm696 = vmand %vm493, %vm565
        %v697 = vsel %vm695, 1, 0
        %v698 = vsel %vm696, 1, 0
        %vm699 = vcmp.eq.s32.totalorder %v697, 1
        %vm700 = vcmp.eq.s32.totalorder %v698, 1
        %v701 = vsel %vm699, %v694, 0.0
        %v702 = vsel %vm700, %v693, 0.0
        %703 = vset.pattern.permute.xlu0 5
        %704 = vperm.xlu0 %703, %v483
        %v705 = vpop.permute.xlu0 %704
        %v707 = vmul.f32 %v705, %v701
        %v708 = vmul.f32 %v705, %v702
        %v709 = vadd.f32 %v617, %v707
        %v710 = vadd.f32 %v618, %v708
        %711 = vrot.lane.b32.xlu0 %v481, 45
        %v712 = vpop.permute.xlu0 %711
        %713 = vrot.lane.b32.xlu0 %v482, 45
        %v714 = vpop.permute.xlu0 %713
        %vm715 = vcmp.lt.s32.totalorder %v342, 45
        %v716 = vsel %vm715, %v712, %v714
        %v717 = vsel %vm715, %v714, %v712
        %vm718 = vmand %vm492, %vm570
        %vm719 = vmand %vm493, %vm571
        %v720 = vsel %vm718, 1, 0
        %v721 = vsel %vm719, 1, 0
        %vm722 = vcmp.eq.s32.totalorder %v720, 1
        %vm723 = vcmp.eq.s32.totalorder %v721, 1
        %v724 = vsel %vm722, %v717, 0.0
        %v725 = vsel %vm723, %v716, 0.0
        %726 = vset.pattern.permute.xlu0 6
        %727 = vperm.xlu0 %726, %v483
        %v728 = vpop.permute.xlu0 %727
        %v730 = vmul.f32 %v728, %v724
        %v731 = vmul.f32 %v728, %v725
        %v732 = vadd.f32 %v640, %v730
        %v733 = vadd.f32 %v641, %v731
        %734 = vrot.lane.b32.xlu0 %v481, 35
        %v735 = vpop.permute.xlu0 %734
        %736 = vrot.lane.b32.xlu0 %v482, 35
        %v737 = vpop.permute.xlu0 %736
        %vm738 = vcmp.lt.s32.totalorder %v342, 35
        %v739 = vsel %vm738, %v735, %v737
        %v740 = vsel %vm738, %v737, %v735
        %vm741 = vmand %vm498, %vm534
        %vm742 = vmand %vm499, %vm535
        %v743 = vsel %vm741, 1, 0
        %v744 = vsel %vm742, 1, 0
        %vm745 = vcmp.eq.s32.totalorder %v743, 1
        %vm746 = vcmp.eq.s32.totalorder %v744, 1
        %v747 = vsel %vm745, %v740, 0.0
        %v748 = vsel %vm746, %v739, 0.0
        %749 = vset.pattern.permute.xlu0 7
        %750 = vperm.xlu0 %749, %v483
        %v751 = vpop.permute.xlu0 %750
        %v753 = vmul.f32 %v751, %v747
        %v754 = vmul.f32 %v751, %v748
        %v755 = vadd.f32 %v663, %v753
        %v756 = vadd.f32 %v664, %v754
        %757 = vrot.lane.b32.xlu0 %v481, 34
        %v758 = vpop.permute.xlu0 %757
        %759 = vrot.lane.b32.xlu0 %v482, 34
        %v760 = vpop.permute.xlu0 %759
        %vm761 = vcmp.lt.s32.totalorder %v342, 34
        %v762 = vsel %vm761, %v758, %v760
        %v763 = vsel %vm761, %v760, %v758
        %vm764 = vmand %vm498, %vm540
        %vm765 = vmand %vm499, %vm541
        %v766 = vsel %vm764, 1, 0
        %v767 = vsel %vm765, 1, 0
        %vm768 = vcmp.eq.s32.totalorder %v766, 1
        %vm769 = vcmp.eq.s32.totalorder %v767, 1
        %v770 = vsel %vm768, %v763, 0.0
        %v771 = vsel %vm769, %v762, 0.0
        %772 = vset.pattern.permute.xlu0 8
        %773 = vperm.xlu0 %772, %v483
        %v774 = vpop.permute.xlu0 %773
        %v776 = vmul.f32 %v774, %v770
        %v777 = vmul.f32 %v774, %v771
        %v778 = vadd.f32 %v686, %v776
        %v779 = vadd.f32 %v687, %v777
        %780 = vrot.lane.b32.xlu0 %v481, 33
        %v781 = vpop.permute.xlu0 %780
        %782 = vrot.lane.b32.xlu0 %v482, 33
        %v783 = vpop.permute.xlu0 %782
        %vm784 = vcmp.lt.s32.totalorder %v342, 33
        %v785 = vsel %vm784, %v781, %v783
        %v786 = vsel %vm784, %v783, %v781
        %vm787 = vmand %vm498, %vm546
        %vm788 = vmand %vm499, %vm547
        %v789 = vsel %vm787, 1, 0
        %v790 = vsel %vm788, 1, 0
        %vm791 = vcmp.eq.s32.totalorder %v789, 1
        %vm792 = vcmp.eq.s32.totalorder %v790, 1
        %v793 = vsel %vm791, %v786, 0.0
        %v794 = vsel %vm792, %v785, 0.0
        %795 = vset.pattern.permute.xlu0 9
        %796 = vperm.xlu0 %795, %v483
        %v797 = vpop.permute.xlu0 %796
        %v799 = vmul.f32 %v797, %v793
        %v800 = vmul.f32 %v797, %v794
        %v801 = vadd.f32 %v709, %v799
        %v802 = vadd.f32 %v710, %v800
        %803 = vrot.lane.b32.xlu0 %v481, 32
        %v804 = vpop.permute.xlu0 %803
        %805 = vrot.lane.b32.xlu0 %v482, 32
        %v806 = vpop.permute.xlu0 %805
        %vm807 = vcmp.lt.s32.totalorder %v342, 32
        %v808 = vsel %vm807, %v804, %v806
        %v809 = vsel %vm807, %v806, %v804
        %vm810 = vmand %vm498, %vm552
        %vm811 = vmand %vm499, %vm553
        %v812 = vsel %vm810, 1, 0
        %v813 = vsel %vm811, 1, 0
        %vm814 = vcmp.eq.s32.totalorder %v812, 1
        %vm815 = vcmp.eq.s32.totalorder %v813, 1
        %v816 = vsel %vm814, %v809, 0.0
        %v817 = vsel %vm815, %v808, 0.0
        %818 = vset.pattern.permute.xlu0 10
        %819 = vperm.xlu0 %818, %v483
        %v820 = vpop.permute.xlu0 %819
        %v822 = vmul.f32 %v820, %v816
        %v823 = vmul.f32 %v820, %v817
        %v824 = vadd.f32 %v732, %v822
        %v825 = vadd.f32 %v733, %v823
        %826 = vrot.lane.b32.xlu0 %v481, 31
        %v827 = vpop.permute.xlu0 %826
        %828 = vrot.lane.b32.xlu0 %v482, 31
        %v829 = vpop.permute.xlu0 %828
        %vm830 = vcmp.lt.s32.totalorder %v342, 31
        %v831 = vsel %vm830, %v827, %v829
        %v832 = vsel %vm830, %v829, %v827
        %vm833 = vmand %vm498, %vm558
        %vm834 = vmand %vm499, %vm559
        %v835 = vsel %vm833, 1, 0
        %v836 = vsel %vm834, 1, 0
        %vm837 = vcmp.eq.s32.totalorder %v835, 1
        %vm838 = vcmp.eq.s32.totalorder %v836, 1
        %v839 = vsel %vm837, %v832, 0.0
        %v840 = vsel %vm838, %v831, 0.0
        %841 = vset.pattern.permute.xlu0 11
        %842 = vperm.xlu0 %841, %v483
        %v843 = vpop.permute.xlu0 %842
        %v845 = vmul.f32 %v843, %v839
        %v846 = vmul.f32 %v843, %v840
        %v847 = vadd.f32 %v755, %v845
        %v848 = vadd.f32 %v756, %v846
        %849 = vrot.lane.b32.xlu0 %v481, 30
        %v850 = vpop.permute.xlu0 %849
        %851 = vrot.lane.b32.xlu0 %v482, 30
        %v852 = vpop.permute.xlu0 %851
        %vm853 = vcmp.lt.s32.totalorder %v342, 30
        %v854 = vsel %vm853, %v850, %v852
        %v855 = vsel %vm853, %v852, %v850
        %vm856 = vmand %vm498, %vm564
        %vm857 = vmand %vm499, %vm565
        %v858 = vsel %vm856, 1, 0
        %v859 = vsel %vm857, 1, 0
        %vm860 = vcmp.eq.s32.totalorder %v858, 1
        %vm861 = vcmp.eq.s32.totalorder %v859, 1
        %v862 = vsel %vm860, %v855, 0.0
        %v863 = vsel %vm861, %v854, 0.0
        %864 = vset.pattern.permute.xlu0 12
        %865 = vperm.xlu0 %864, %v483
        %v866 = vpop.permute.xlu0 %865
        %v868 = vmul.f32 %v866, %v862
        %v869 = vmul.f32 %v866, %v863
        %v870 = vadd.f32 %v778, %v868
        %v871 = vadd.f32 %v779, %v869
        %872 = vrot.lane.b32.xlu0 %v481, 29
        %v873 = vpop.permute.xlu0 %872
        %874 = vrot.lane.b32.xlu0 %v482, 29
        %v875 = vpop.permute.xlu0 %874
        %vm876 = vcmp.lt.s32.totalorder %v342, 29
        %v877 = vsel %vm876, %v873, %v875
        %v878 = vsel %vm876, %v875, %v873
        %vm879 = vmand %vm498, %vm570
        %vm880 = vmand %vm499, %vm571
        %v881 = vsel %vm879, 1, 0
        %v882 = vsel %vm880, 1, 0
        %vm883 = vcmp.eq.s32.totalorder %v881, 1
        %vm884 = vcmp.eq.s32.totalorder %v882, 1
        %v885 = vsel %vm883, %v878, 0.0
        %v886 = vsel %vm884, %v877, 0.0
        %887 = vset.pattern.permute.xlu0 13
        %888 = vperm.xlu0 %887, %v483
        %v889 = vpop.permute.xlu0 %888
        %v891 = vmul.f32 %v889, %v885
        %v892 = vmul.f32 %v889, %v886
        %v893 = vadd.f32 %v801, %v891
        %v894 = vadd.f32 %v802, %v892
        %895 = vrot.lane.b32.xlu0 %v481, 19
        %v896 = vpop.permute.xlu0 %895
        %897 = vrot.lane.b32.xlu0 %v482, 19
        %v898 = vpop.permute.xlu0 %897
        %vm899 = vcmp.lt.s32.totalorder %v342, 19
        %v900 = vsel %vm899, %v896, %v898
        %v901 = vsel %vm899, %v898, %v896
        %vm902 = vmand %vm504, %vm534
        %vm903 = vmand %vm505, %vm535
        %v904 = vsel %vm902, 1, 0
        %v905 = vsel %vm903, 1, 0
        %vm906 = vcmp.eq.s32.totalorder %v904, 1
        %vm907 = vcmp.eq.s32.totalorder %v905, 1
        %v908 = vsel %vm906, %v901, 0.0
        %v909 = vsel %vm907, %v900, 0.0
        %910 = vset.pattern.permute.xlu0 14
        %911 = vperm.xlu0 %910, %v483
        %v912 = vpop.permute.xlu0 %911
        %v914 = vmul.f32 %v912, %v908
        %v915 = vmul.f32 %v912, %v909
        %v916 = vadd.f32 %v824, %v914
        %v917 = vadd.f32 %v825, %v915
        %918 = vrot.lane.b32.xlu0 %v481, 18
        %v919 = vpop.permute.xlu0 %918
        %920 = vrot.lane.b32.xlu0 %v482, 18
        %v921 = vpop.permute.xlu0 %920
        %vm922 = vcmp.lt.s32.totalorder %v342, 18
        %v923 = vsel %vm922, %v919, %v921
        %v924 = vsel %vm922, %v921, %v919
        %vm925 = vmand %vm504, %vm540
        %vm926 = vmand %vm505, %vm541
        %v927 = vsel %vm925, 1, 0
        %v928 = vsel %vm926, 1, 0
        %vm929 = vcmp.eq.s32.totalorder %v927, 1
        %vm930 = vcmp.eq.s32.totalorder %v928, 1
        %v931 = vsel %vm929, %v924, 0.0
        %v932 = vsel %vm930, %v923, 0.0
        %933 = vset.pattern.permute.xlu0 15
        %934 = vperm.xlu0 %933, %v483
        %v935 = vpop.permute.xlu0 %934
        %v937 = vmul.f32 %v935, %v931
        %v938 = vmul.f32 %v935, %v932
        %v939 = vadd.f32 %v847, %v937
        %v940 = vadd.f32 %v848, %v938
        %941 = vrot.lane.b32.xlu0 %v481, 17
        %v942 = vpop.permute.xlu0 %941
        %943 = vrot.lane.b32.xlu0 %v482, 17
        %v944 = vpop.permute.xlu0 %943
        %vm945 = vcmp.lt.s32.totalorder %v342, 17
        %v946 = vsel %vm945, %v942, %v944
        %v947 = vsel %vm945, %v944, %v942
        %vm948 = vmand %vm504, %vm546
        %vm949 = vmand %vm505, %vm547
        %v950 = vsel %vm948, 1, 0
        %v951 = vsel %vm949, 1, 0
        %vm952 = vcmp.eq.s32.totalorder %v950, 1
        %vm953 = vcmp.eq.s32.totalorder %v951, 1
        %v954 = vsel %vm952, %v947, 0.0
        %v955 = vsel %vm953, %v946, 0.0
        %956 = vset.pattern.permute.xlu0 16
        %957 = vperm.xlu0 %956, %v483
        %v958 = vpop.permute.xlu0 %957
        %v960 = vmul.f32 %v958, %v954
        %v961 = vmul.f32 %v958, %v955
        %v962 = vadd.f32 %v870, %v960
        %v963 = vadd.f32 %v871, %v961
        %964 = vrot.lane.b32.xlu0 %v481, 16
        %v965 = vpop.permute.xlu0 %964
        %966 = vrot.lane.b32.xlu0 %v482, 16
        %v967 = vpop.permute.xlu0 %966
        %vm968 = vcmp.lt.s32.totalorder %v342, 16
        %v969 = vsel %vm968, %v965, %v967
        %v970 = vsel %vm968, %v967, %v965
        %vm971 = vmand %vm504, %vm552
        %vm972 = vmand %vm505, %vm553
        %v973 = vsel %vm971, 1, 0
        %v974 = vsel %vm972, 1, 0
        %vm975 = vcmp.eq.s32.totalorder %v973, 1
        %vm976 = vcmp.eq.s32.totalorder %v974, 1
        %v977 = vsel %vm975, %v970, 0.0
        %v978 = vsel %vm976, %v969, 0.0
        %979 = vset.pattern.permute.xlu0 17
        %980 = vperm.xlu0 %979, %v483
        %v981 = vpop.permute.xlu0 %980
        %v983 = vmul.f32 %v981, %v977
        %v984 = vmul.f32 %v981, %v978
        %v985 = vadd.f32 %v893, %v983
        %v986 = vadd.f32 %v894, %v984
        %987 = vrot.lane.b32.xlu0 %v481, 15
        %v988 = vpop.permute.xlu0 %987
        %989 = vrot.lane.b32.xlu0 %v482, 15
        %v990 = vpop.permute.xlu0 %989
        %vm991 = vcmp.lt.s32.totalorder %v342, 15
        %v992 = vsel %vm991, %v988, %v990
        %v993 = vsel %vm991, %v990, %v988
        %vm994 = vmand %vm504, %vm558
        %vm995 = vmand %vm505, %vm559
        %v996 = vsel %vm994, 1, 0
        %v997 = vsel %vm995, 1, 0
        %vm998 = vcmp.eq.s32.totalorder %v996, 1
        %vm999 = vcmp.eq.s32.totalorder %v997, 1
        %v1000 = vsel %vm998, %v993, 0.0
        %v1001 = vsel %vm999, %v992, 0.0
        %1002 = vset.pattern.permute.xlu0 18
        %1003 = vperm.xlu0 %1002, %v483
        %v1004 = vpop.permute.xlu0 %1003
        %v1006 = vmul.f32 %v1004, %v1000
        %v1007 = vmul.f32 %v1004, %v1001
        %v1008 = vadd.f32 %v916, %v1006
        %v1009 = vadd.f32 %v917, %v1007
        %1010 = vrot.lane.b32.xlu0 %v481, 14
        %v1011 = vpop.permute.xlu0 %1010
        %1012 = vrot.lane.b32.xlu0 %v482, 14
        %v1013 = vpop.permute.xlu0 %1012
        %vm1014 = vcmp.lt.s32.totalorder %v342, 14
        %v1015 = vsel %vm1014, %v1011, %v1013
        %v1016 = vsel %vm1014, %v1013, %v1011
        %vm1017 = vmand %vm504, %vm564
        %vm1018 = vmand %vm505, %vm565
        %v1019 = vsel %vm1017, 1, 0
        %v1020 = vsel %vm1018, 1, 0
        %vm1021 = vcmp.eq.s32.totalorder %v1019, 1
        %vm1022 = vcmp.eq.s32.totalorder %v1020, 1
        %v1023 = vsel %vm1021, %v1016, 0.0
        %v1024 = vsel %vm1022, %v1015, 0.0
        %1025 = vset.pattern.permute.xlu0 19
        %1026 = vperm.xlu0 %1025, %v483
        %v1027 = vpop.permute.xlu0 %1026
        %v1029 = vmul.f32 %v1027, %v1023
        %v1030 = vmul.f32 %v1027, %v1024
        %v1031 = vadd.f32 %v939, %v1029
        %v1032 = vadd.f32 %v940, %v1030
        %1033 = vrot.lane.b32.xlu0 %v481, 13
        %v1034 = vpop.permute.xlu0 %1033
        %1035 = vrot.lane.b32.xlu0 %v482, 13
        %v1036 = vpop.permute.xlu0 %1035
        %vm1037 = vcmp.lt.s32.totalorder %v342, 13
        %v1038 = vsel %vm1037, %v1034, %v1036
        %v1039 = vsel %vm1037, %v1036, %v1034
        %vm1040 = vmand %vm504, %vm570
        %vm1041 = vmand %vm505, %vm571
        %v1042 = vsel %vm1040, 1, 0
        %v1043 = vsel %vm1041, 1, 0
        %vm1044 = vcmp.eq.s32.totalorder %v1042, 1
        %vm1045 = vcmp.eq.s32.totalorder %v1043, 1
        %v1046 = vsel %vm1044, %v1039, 0.0
        %v1047 = vsel %vm1045, %v1038, 0.0
        %1048 = vset.pattern.permute.xlu0 20
        %1049 = vperm.xlu0 %1048, %v483
        %v1050 = vpop.permute.xlu0 %1049
        %v1052 = vmul.f32 %v1050, %v1046
        %v1053 = vmul.f32 %v1050, %v1047
        %v1054 = vadd.f32 %v962, %v1052
        %v1055 = vadd.f32 %v963, %v1053
        %1056 = vrot.lane.b32.xlu0 %v481, 3
        %v1057 = vpop.permute.xlu0 %1056
        %1058 = vrot.lane.b32.xlu0 %v482, 3
        %v1059 = vpop.permute.xlu0 %1058
        %vm1060 = vcmp.lt.s32.totalorder %v342, 3
        %v1061 = vsel %vm1060, %v1057, %v1059
        %v1062 = vsel %vm1060, %v1059, %v1057
        %vm1063 = vmand %vm510, %vm534
        %vm1064 = vmand %vm511, %vm535
        %v1065 = vsel %vm1063, 1, 0
        %v1066 = vsel %vm1064, 1, 0
        %vm1067 = vcmp.eq.s32.totalorder %v1065, 1
        %vm1068 = vcmp.eq.s32.totalorder %v1066, 1
        %v1069 = vsel %vm1067, %v1062, 0.0
        %v1070 = vsel %vm1068, %v1061, 0.0
        %1071 = vset.pattern.permute.xlu0 21
        %1072 = vperm.xlu0 %1071, %v483
        %v1073 = vpop.permute.xlu0 %1072
        %v1075 = vmul.f32 %v1073, %v1069
        %v1076 = vmul.f32 %v1073, %v1070
        %v1077 = vadd.f32 %v985, %v1075
        %v1078 = vadd.f32 %v986, %v1076
        %1079 = vrot.lane.b32.xlu0 %v481, 2
        %v1080 = vpop.permute.xlu0 %1079
        %1081 = vrot.lane.b32.xlu0 %v482, 2
        %v1082 = vpop.permute.xlu0 %1081
        %vm1083 = vcmp.lt.s32.totalorder %v342, 2
        %v1084 = vsel %vm1083, %v1080, %v1082
        %v1085 = vsel %vm1083, %v1082, %v1080
        %vm1086 = vmand %vm510, %vm540
        %vm1087 = vmand %vm511, %vm541
        %v1088 = vsel %vm1086, 1, 0
        %v1089 = vsel %vm1087, 1, 0
        %vm1090 = vcmp.eq.s32.totalorder %v1088, 1
        %vm1091 = vcmp.eq.s32.totalorder %v1089, 1
        %v1092 = vsel %vm1090, %v1085, 0.0
        %v1093 = vsel %vm1091, %v1084, 0.0
        %1094 = vset.pattern.permute.xlu0 22
        %1095 = vperm.xlu0 %1094, %v483
        %v1096 = vpop.permute.xlu0 %1095
        %v1098 = vmul.f32 %v1096, %v1092
        %v1099 = vmul.f32 %v1096, %v1093
        %v1100 = vadd.f32 %v1008, %v1098
        %v1101 = vadd.f32 %v1009, %v1099
        %1102 = vrot.lane.b32.xlu0 %v481, 1
        %v1103 = vpop.permute.xlu0 %1102
        %1104 = vrot.lane.b32.xlu0 %v482, 1
        %v1105 = vpop.permute.xlu0 %1104
        %vm1106 = vcmp.lt.s32.totalorder %v342, 1
        %v1107 = vsel %vm1106, %v1103, %v1105
        %v1108 = vsel %vm1106, %v1105, %v1103
        %vm1109 = vmand %vm510, %vm546
        %vm1110 = vmand %vm511, %vm547
        %v1111 = vsel %vm1109, 1, 0
        %v1112 = vsel %vm1110, 1, 0
        %vm1113 = vcmp.eq.s32.totalorder %v1111, 1
        %vm1114 = vcmp.eq.s32.totalorder %v1112, 1
        %v1115 = vsel %vm1113, %v1108, 0.0
        %v1116 = vsel %vm1114, %v1107, 0.0
        %1117 = vset.pattern.permute.xlu0 23
        %1118 = vperm.xlu0 %1117, %v483
        %v1119 = vpop.permute.xlu0 %1118
        %v1121 = vmul.f32 %v1119, %v1115
        %v1122 = vmul.f32 %v1119, %v1116
        %v1123 = vadd.f32 %v1031, %v1121
        %v1124 = vadd.f32 %v1032, %v1122
        %1125 = vset.pattern.permute.xlu0 24
        %1126 = vperm.xlu0 %1125, %v483
        %v1127 = vpop.permute.xlu0 %1126
        %v1129 = vmul.f32 %v1127, %v481
        %v1130 = vmul.f32 %v1127, %v482
        %v1131 = vadd.f32 %v1054, %v1129
        %v1132 = vadd.f32 %v1055, %v1130
        %1133 = vrot.lane.b32.xlu0 %v481, 127
        %v1134 = vpop.permute.xlu0 %1133
        %1135 = vrot.lane.b32.xlu0 %v482, 127
        %v1136 = vpop.permute.xlu0 %1135
        %vm1137 = vcmp.lt.s32.totalorder %v342, 127
        %v1138 = vsel %vm1137, %v1134, %v1136
        %v1139 = vsel %vm1137, %v1136, %v1134
        %vm1140 = vmand %vm510, %vm558
        %vm1141 = vmand %vm511, %vm559
        %v1142 = vsel %vm1140, 1, 0
        %v1143 = vsel %vm1141, 1, 0
        %vm1144 = vcmp.eq.s32.totalorder %v1142, 1
        %vm1145 = vcmp.eq.s32.totalorder %v1143, 1
        %v1146 = vsel %vm1144, %v1138, 0.0
        %v1147 = vsel %vm1145, %v1139, 0.0
        %1148 = vset.pattern.permute.xlu0 25
        %1149 = vperm.xlu0 %1148, %v483
        %v1150 = vpop.permute.xlu0 %1149
        %v1152 = vmul.f32 %v1150, %v1146
        %v1153 = vmul.f32 %v1150, %v1147
        %v1154 = vadd.f32 %v1077, %v1152
        %v1155 = vadd.f32 %v1078, %v1153
        %1156 = vrot.lane.b32.xlu0 %v481, 126
        %v1157 = vpop.permute.xlu0 %1156
        %1158 = vrot.lane.b32.xlu0 %v482, 126
        %v1159 = vpop.permute.xlu0 %1158
        %vm1160 = vcmp.lt.s32.totalorder %v342, 126
        %v1161 = vsel %vm1160, %v1157, %v1159
        %v1162 = vsel %vm1160, %v1159, %v1157
        %vm1163 = vmand %vm510, %vm564
        %vm1164 = vmand %vm511, %vm565
        %v1165 = vsel %vm1163, 1, 0
        %v1166 = vsel %vm1164, 1, 0
        %vm1167 = vcmp.eq.s32.totalorder %v1165, 1
        %vm1168 = vcmp.eq.s32.totalorder %v1166, 1
        %v1169 = vsel %vm1167, %v1161, 0.0
        %v1170 = vsel %vm1168, %v1162, 0.0
        %1171 = vset.pattern.permute.xlu0 26
        %1172 = vperm.xlu0 %1171, %v483
        %v1173 = vpop.permute.xlu0 %1172
        %v1175 = vmul.f32 %v1173, %v1169
        %v1176 = vmul.f32 %v1173, %v1170
        %v1177 = vadd.f32 %v1100, %v1175
        %v1178 = vadd.f32 %v1101, %v1176
        %1179 = vrot.lane.b32.xlu0 %v481, 125
        %v1180 = vpop.permute.xlu0 %1179
        %1181 = vrot.lane.b32.xlu0 %v482, 125
        %v1182 = vpop.permute.xlu0 %1181
        %vm1183 = vcmp.lt.s32.totalorder %v342, 125
        %v1184 = vsel %vm1183, %v1180, %v1182
        %v1185 = vsel %vm1183, %v1182, %v1180
        %vm1186 = vmand %vm510, %vm570
        %vm1187 = vmand %vm511, %vm571
        %v1188 = vsel %vm1186, 1, 0
        %v1189 = vsel %vm1187, 1, 0
        %vm1190 = vcmp.eq.s32.totalorder %v1188, 1
        %vm1191 = vcmp.eq.s32.totalorder %v1189, 1
        %v1192 = vsel %vm1190, %v1184, 0.0
        %v1193 = vsel %vm1191, %v1185, 0.0
        %1194 = vset.pattern.permute.xlu0 27
        %1195 = vperm.xlu0 %1194, %v483
        %v1196 = vpop.permute.xlu0 %1195
        %v1198 = vmul.f32 %v1196, %v1192
        %v1199 = vmul.f32 %v1196, %v1193
        %v1200 = vadd.f32 %v1123, %v1198
        %v1201 = vadd.f32 %v1124, %v1199
        %1202 = vrot.lane.b32.xlu0 %v481, 115
        %v1203 = vpop.permute.xlu0 %1202
        %1204 = vrot.lane.b32.xlu0 %v482, 115
        %v1205 = vpop.permute.xlu0 %1204
        %vm1206 = vcmp.lt.s32.totalorder %v342, 115
        %v1207 = vsel %vm1206, %v1203, %v1205
        %v1208 = vsel %vm1206, %v1205, %v1203
        %vm1209 = vmand %vm516, %vm534
        %vm1210 = vmand %vm517, %vm535
        %v1211 = vsel %vm1209, 1, 0
        %v1212 = vsel %vm1210, 1, 0
        %vm1213 = vcmp.eq.s32.totalorder %v1211, 1
        %vm1214 = vcmp.eq.s32.totalorder %v1212, 1
        %v1215 = vsel %vm1213, %v1207, 0.0
        %v1216 = vsel %vm1214, %v1208, 0.0
        %1217 = vset.pattern.permute.xlu0 28
        %1218 = vperm.xlu0 %1217, %v483
        %v1219 = vpop.permute.xlu0 %1218
        %v1221 = vmul.f32 %v1219, %v1215
        %v1222 = vmul.f32 %v1219, %v1216
        %v1223 = vadd.f32 %v1131, %v1221
        %v1224 = vadd.f32 %v1132, %v1222
        %1225 = vrot.lane.b32.xlu0 %v481, 114
        %v1226 = vpop.permute.xlu0 %1225
        %1227 = vrot.lane.b32.xlu0 %v482, 114
        %v1228 = vpop.permute.xlu0 %1227
        %vm1229 = vcmp.lt.s32.totalorder %v342, 114
        %v1230 = vsel %vm1229, %v1226, %v1228
        %v1231 = vsel %vm1229, %v1228, %v1226
        %vm1232 = vmand %vm516, %vm540
        %vm1233 = vmand %vm517, %vm541
        %v1234 = vsel %vm1232, 1, 0
        %v1235 = vsel %vm1233, 1, 0
        %vm1236 = vcmp.eq.s32.totalorder %v1234, 1
        %vm1237 = vcmp.eq.s32.totalorder %v1235, 1
        %v1238 = vsel %vm1236, %v1230, 0.0
        %v1239 = vsel %vm1237, %v1231, 0.0
        %1240 = vset.pattern.permute.xlu0 29
        %1241 = vperm.xlu0 %1240, %v483
        %v1242 = vpop.permute.xlu0 %1241
        %v1244 = vmul.f32 %v1242, %v1238
        %v1245 = vmul.f32 %v1242, %v1239
        %v1246 = vadd.f32 %v1154, %v1244
        %v1247 = vadd.f32 %v1155, %v1245
        %1248 = vrot.lane.b32.xlu0 %v481, 113
        %v1249 = vpop.permute.xlu0 %1248
        %1250 = vrot.lane.b32.xlu0 %v482, 113
        %v1251 = vpop.permute.xlu0 %1250
        %vm1252 = vcmp.lt.s32.totalorder %v342, 113
        %v1253 = vsel %vm1252, %v1249, %v1251
        %v1254 = vsel %vm1252, %v1251, %v1249
        %vm1255 = vmand %vm516, %vm546
        %vm1256 = vmand %vm517, %vm547
        %v1257 = vsel %vm1255, 1, 0
        %v1258 = vsel %vm1256, 1, 0
        %vm1259 = vcmp.eq.s32.totalorder %v1257, 1
        %vm1260 = vcmp.eq.s32.totalorder %v1258, 1
        %v1261 = vsel %vm1259, %v1253, 0.0
        %v1262 = vsel %vm1260, %v1254, 0.0
        %1263 = vset.pattern.permute.xlu0 30
        %1264 = vperm.xlu0 %1263, %v483
        %v1265 = vpop.permute.xlu0 %1264
        %v1267 = vmul.f32 %v1265, %v1261
        %v1268 = vmul.f32 %v1265, %v1262
        %v1269 = vadd.f32 %v1177, %v1267
        %v1270 = vadd.f32 %v1178, %v1268
        %1271 = vrot.lane.b32.xlu0 %v481, 112
        %v1272 = vpop.permute.xlu0 %1271
        %1273 = vrot.lane.b32.xlu0 %v482, 112
        %v1274 = vpop.permute.xlu0 %1273
        %vm1275 = vcmp.lt.s32.totalorder %v342, 112
        %v1276 = vsel %vm1275, %v1272, %v1274
        %v1277 = vsel %vm1275, %v1274, %v1272
        %vm1278 = vmand %vm516, %vm552
        %vm1279 = vmand %vm517, %vm553
        %v1280 = vsel %vm1278, 1, 0
        %v1281 = vsel %vm1279, 1, 0
        %vm1282 = vcmp.eq.s32.totalorder %v1280, 1
        %vm1283 = vcmp.eq.s32.totalorder %v1281, 1
        %v1284 = vsel %vm1282, %v1276, 0.0
        %v1285 = vsel %vm1283, %v1277, 0.0
        %1286 = vset.pattern.permute.xlu0 31
        %1287 = vperm.xlu0 %1286, %v483
        %v1288 = vpop.permute.xlu0 %1287
        %v1290 = vmul.f32 %v1288, %v1284
        %v1291 = vmul.f32 %v1288, %v1285
        %v1292 = vadd.f32 %v1200, %v1290
        %v1293 = vadd.f32 %v1201, %v1291
        %1294 = vrot.lane.b32.xlu0 %v481, 111
        %v1295 = vpop.permute.xlu0 %1294
        %1296 = vrot.lane.b32.xlu0 %v482, 111
        %v1297 = vpop.permute.xlu0 %1296
        %vm1298 = vcmp.lt.s32.totalorder %v342, 111
        %v1299 = vsel %vm1298, %v1295, %v1297
        %v1300 = vsel %vm1298, %v1297, %v1295
        %vm1301 = vmand %vm516, %vm558
        %vm1302 = vmand %vm517, %vm559
        %v1303 = vsel %vm1301, 1, 0
        %v1304 = vsel %vm1302, 1, 0
        %vm1305 = vcmp.eq.s32.totalorder %v1303, 1
        %vm1306 = vcmp.eq.s32.totalorder %v1304, 1
        %v1307 = vsel %vm1305, %v1299, 0.0
        %v1308 = vsel %vm1306, %v1300, 0.0
        %1309 = vset.pattern.permute.xlu0 32
        %1310 = vperm.xlu0 %1309, %v483
        %v1311 = vpop.permute.xlu0 %1310
        %v1313 = vmul.f32 %v1311, %v1307
        %v1314 = vmul.f32 %v1311, %v1308
        %v1315 = vadd.f32 %v1223, %v1313
        %v1316 = vadd.f32 %v1224, %v1314
        %1317 = vrot.lane.b32.xlu0 %v481, 110
        %v1318 = vpop.permute.xlu0 %1317
        %1319 = vrot.lane.b32.xlu0 %v482, 110
        %v1320 = vpop.permute.xlu0 %1319
        %vm1321 = vcmp.lt.s32.totalorder %v342, 110
        %v1322 = vsel %vm1321, %v1318, %v1320
        %v1323 = vsel %vm1321, %v1320, %v1318
        %vm1324 = vmand %vm516, %vm564
        %vm1325 = vmand %vm517, %vm565
        %v1326 = vsel %vm1324, 1, 0
        %v1327 = vsel %vm1325, 1, 0
        %vm1328 = vcmp.eq.s32.totalorder %v1326, 1
        %vm1329 = vcmp.eq.s32.totalorder %v1327, 1
        %v1330 = vsel %vm1328, %v1322, 0.0
        %v1331 = vsel %vm1329, %v1323, 0.0
        %1332 = vset.pattern.permute.xlu0 33
        %1333 = vperm.xlu0 %1332, %v483
        %v1334 = vpop.permute.xlu0 %1333
        %v1336 = vmul.f32 %v1334, %v1330
        %v1337 = vmul.f32 %v1334, %v1331
        %v1338 = vadd.f32 %v1246, %v1336
        %v1339 = vadd.f32 %v1247, %v1337
        %1340 = vrot.lane.b32.xlu0 %v481, 109
        %v1341 = vpop.permute.xlu0 %1340
        %1342 = vrot.lane.b32.xlu0 %v482, 109
        %v1343 = vpop.permute.xlu0 %1342
        %vm1344 = vcmp.lt.s32.totalorder %v342, 109
        %v1345 = vsel %vm1344, %v1341, %v1343
        %v1346 = vsel %vm1344, %v1343, %v1341
        %vm1347 = vmand %vm516, %vm570
        %vm1348 = vmand %vm517, %vm571
        %v1349 = vsel %vm1347, 1, 0
        %v1350 = vsel %vm1348, 1, 0
        %vm1351 = vcmp.eq.s32.totalorder %v1349, 1
        %vm1352 = vcmp.eq.s32.totalorder %v1350, 1
        %v1353 = vsel %vm1351, %v1345, 0.0
        %v1354 = vsel %vm1352, %v1346, 0.0
        %1355 = vset.pattern.permute.xlu0 34
        %1356 = vperm.xlu0 %1355, %v483
        %v1357 = vpop.permute.xlu0 %1356
        %v1359 = vmul.f32 %v1357, %v1353
        %v1360 = vmul.f32 %v1357, %v1354
        %v1361 = vadd.f32 %v1269, %v1359
        %v1362 = vadd.f32 %v1270, %v1360
        %1363 = vrot.lane.b32.xlu0 %v481, 99
        %v1364 = vpop.permute.xlu0 %1363
        %1365 = vrot.lane.b32.xlu0 %v482, 99
        %v1366 = vpop.permute.xlu0 %1365
        %vm1367 = vcmp.lt.s32.totalorder %v342, 99
        %v1368 = vsel %vm1367, %v1364, %v1366
        %v1369 = vsel %vm1367, %v1366, %v1364
        %vm1370 = vmand %vm522, %vm534
        %vm1371 = vmand %vm523, %vm535
        %v1372 = vsel %vm1370, 1, 0
        %v1373 = vsel %vm1371, 1, 0
        %vm1374 = vcmp.eq.s32.totalorder %v1372, 1
        %vm1375 = vcmp.eq.s32.totalorder %v1373, 1
        %v1376 = vsel %vm1374, %v1368, 0.0
        %v1377 = vsel %vm1375, %v1369, 0.0
        %1378 = vset.pattern.permute.xlu0 35
        %1379 = vperm.xlu0 %1378, %v483
        %v1380 = vpop.permute.xlu0 %1379
        %v1382 = vmul.f32 %v1380, %v1376
        %v1383 = vmul.f32 %v1380, %v1377
        %v1384 = vadd.f32 %v1292, %v1382
        %v1385 = vadd.f32 %v1293, %v1383
        %1386 = vrot.lane.b32.xlu0 %v481, 98
        %v1387 = vpop.permute.xlu0 %1386
        %1388 = vrot.lane.b32.xlu0 %v482, 98
        %v1389 = vpop.permute.xlu0 %1388
        %vm1390 = vcmp.lt.s32.totalorder %v342, 98
        %v1391 = vsel %vm1390, %v1387, %v1389
        %v1392 = vsel %vm1390, %v1389, %v1387
        %vm1393 = vmand %vm522, %vm540
        %vm1394 = vmand %vm523, %vm541
        %v1395 = vsel %vm1393, 1, 0
        %v1396 = vsel %vm1394, 1, 0
        %vm1397 = vcmp.eq.s32.totalorder %v1395, 1
        %vm1398 = vcmp.eq.s32.totalorder %v1396, 1
        %v1399 = vsel %vm1397, %v1391, 0.0
        %v1400 = vsel %vm1398, %v1392, 0.0
        %1401 = vset.pattern.permute.xlu0 36
        %1402 = vperm.xlu0 %1401, %v483
        %v1403 = vpop.permute.xlu0 %1402
        %v1405 = vmul.f32 %v1403, %v1399
        %v1406 = vmul.f32 %v1403, %v1400
        %v1407 = vadd.f32 %v1315, %v1405
        %v1408 = vadd.f32 %v1316, %v1406
        %1409 = vrot.lane.b32.xlu0 %v481, 97
        %v1410 = vpop.permute.xlu0 %1409
        %1411 = vrot.lane.b32.xlu0 %v482, 97
        %v1412 = vpop.permute.xlu0 %1411
        %vm1413 = vcmp.lt.s32.totalorder %v342, 97
        %v1414 = vsel %vm1413, %v1410, %v1412
        %v1415 = vsel %vm1413, %v1412, %v1410
        %vm1416 = vmand %vm522, %vm546
        %vm1417 = vmand %vm523, %vm547
        %v1418 = vsel %vm1416, 1, 0
        %v1419 = vsel %vm1417, 1, 0
        %vm1420 = vcmp.eq.s32.totalorder %v1418, 1
        %vm1421 = vcmp.eq.s32.totalorder %v1419, 1
        %v1422 = vsel %vm1420, %v1414, 0.0
        %v1423 = vsel %vm1421, %v1415, 0.0
        %1424 = vset.pattern.permute.xlu0 37
        %1425 = vperm.xlu0 %1424, %v483
        %v1426 = vpop.permute.xlu0 %1425
        %v1428 = vmul.f32 %v1426, %v1422
        %v1429 = vmul.f32 %v1426, %v1423
        %v1430 = vadd.f32 %v1338, %v1428
        %v1431 = vadd.f32 %v1339, %v1429
        %1432 = vrot.lane.b32.xlu0 %v481, 96
        %v1433 = vpop.permute.xlu0 %1432
        %1434 = vrot.lane.b32.xlu0 %v482, 96
        %v1435 = vpop.permute.xlu0 %1434
        %vm1436 = vcmp.lt.s32.totalorder %v342, 96
        %v1437 = vsel %vm1436, %v1433, %v1435
        %v1438 = vsel %vm1436, %v1435, %v1433
        %vm1439 = vmand %vm522, %vm552
        %vm1440 = vmand %vm523, %vm553
        %v1441 = vsel %vm1439, 1, 0
        %v1442 = vsel %vm1440, 1, 0
        %vm1443 = vcmp.eq.s32.totalorder %v1441, 1
        %vm1444 = vcmp.eq.s32.totalorder %v1442, 1
        %v1445 = vsel %vm1443, %v1437, 0.0
        %v1446 = vsel %vm1444, %v1438, 0.0
        %1447 = vset.pattern.permute.xlu0 38
        %1448 = vperm.xlu0 %1447, %v483
        %v1449 = vpop.permute.xlu0 %1448
        %v1451 = vmul.f32 %v1449, %v1445
        %v1452 = vmul.f32 %v1449, %v1446
        %v1453 = vadd.f32 %v1361, %v1451
        %v1454 = vadd.f32 %v1362, %v1452
        %1455 = vrot.lane.b32.xlu0 %v481, 95
        %v1456 = vpop.permute.xlu0 %1455
        %1457 = vrot.lane.b32.xlu0 %v482, 95
        %v1458 = vpop.permute.xlu0 %1457
        %vm1459 = vcmp.lt.s32.totalorder %v342, 95
        %v1460 = vsel %vm1459, %v1456, %v1458
        %v1461 = vsel %vm1459, %v1458, %v1456
        %vm1462 = vmand %vm522, %vm558
        %vm1463 = vmand %vm523, %vm559
        %v1464 = vsel %vm1462, 1, 0
        %v1465 = vsel %vm1463, 1, 0
        %vm1466 = vcmp.eq.s32.totalorder %v1464, 1
        %vm1467 = vcmp.eq.s32.totalorder %v1465, 1
        %v1468 = vsel %vm1466, %v1460, 0.0
        %v1469 = vsel %vm1467, %v1461, 0.0
        %1470 = vset.pattern.permute.xlu0 39
        %1471 = vperm.xlu0 %1470, %v483
        %v1472 = vpop.permute.xlu0 %1471
        %v1474 = vmul.f32 %v1472, %v1468
        %v1475 = vmul.f32 %v1472, %v1469
        %v1476 = vadd.f32 %v1384, %v1474
        %v1477 = vadd.f32 %v1385, %v1475
        %1478 = vrot.lane.b32.xlu0 %v481, 94
        %v1479 = vpop.permute.xlu0 %1478
        %1480 = vrot.lane.b32.xlu0 %v482, 94
        %v1481 = vpop.permute.xlu0 %1480
        %vm1482 = vcmp.lt.s32.totalorder %v342, 94
        %v1483 = vsel %vm1482, %v1479, %v1481
        %v1484 = vsel %vm1482, %v1481, %v1479
        %vm1485 = vmand %vm522, %vm564
        %vm1486 = vmand %vm523, %vm565
        %v1487 = vsel %vm1485, 1, 0
        %v1488 = vsel %vm1486, 1, 0
        %vm1489 = vcmp.eq.s32.totalorder %v1487, 1
        %vm1490 = vcmp.eq.s32.totalorder %v1488, 1
        %v1491 = vsel %vm1489, %v1483, 0.0
        %v1492 = vsel %vm1490, %v1484, 0.0
        %1493 = vset.pattern.permute.xlu0 40
        %1494 = vperm.xlu0 %1493, %v483
        %v1495 = vpop.permute.xlu0 %1494
        %v1497 = vmul.f32 %v1495, %v1491
        %v1498 = vmul.f32 %v1495, %v1492
        %v1499 = vadd.f32 %v1407, %v1497
        %v1500 = vadd.f32 %v1408, %v1498
        %1501 = vrot.lane.b32.xlu0 %v481, 93
        %v1502 = vpop.permute.xlu0 %1501
        %1503 = vrot.lane.b32.xlu0 %v482, 93
        %v1504 = vpop.permute.xlu0 %1503
        %vm1505 = vcmp.lt.s32.totalorder %v342, 93
        %v1506 = vsel %vm1505, %v1502, %v1504
        %v1507 = vsel %vm1505, %v1504, %v1502
        %vm1508 = vmand %vm522, %vm570
        %vm1509 = vmand %vm523, %vm571
        %v1510 = vsel %vm1508, 1, 0
        %v1511 = vsel %vm1509, 1, 0
        %vm1512 = vcmp.eq.s32.totalorder %v1510, 1
        %vm1513 = vcmp.eq.s32.totalorder %v1511, 1
        %v1514 = vsel %vm1512, %v1506, 0.0
        %v1515 = vsel %vm1513, %v1507, 0.0
        %1516 = vset.pattern.permute.xlu0 41
        %1517 = vperm.xlu0 %1516, %v483
        %v1518 = vpop.permute.xlu0 %1517
        %v1520 = vmul.f32 %v1518, %v1514
        %v1521 = vmul.f32 %v1518, %v1515
        %v1522 = vadd.f32 %v1430, %v1520
        %v1523 = vadd.f32 %v1431, %v1521
        %1524 = vrot.lane.b32.xlu0 %v481, 83
        %v1525 = vpop.permute.xlu0 %1524
        %1526 = vrot.lane.b32.xlu0 %v482, 83
        %v1527 = vpop.permute.xlu0 %1526
        %vm1528 = vcmp.lt.s32.totalorder %v342, 83
        %v1529 = vsel %vm1528, %v1525, %v1527
        %v1530 = vsel %vm1528, %v1527, %v1525
        %vm1531 = vmand %vm528, %vm534
        %vm1532 = vmand %vm529, %vm535
        %v1533 = vsel %vm1531, 1, 0
        %v1534 = vsel %vm1532, 1, 0
        %vm1535 = vcmp.eq.s32.totalorder %v1533, 1
        %vm1536 = vcmp.eq.s32.totalorder %v1534, 1
        %v1537 = vsel %vm1535, %v1529, 0.0
        %v1538 = vsel %vm1536, %v1530, 0.0
        %1539 = vset.pattern.permute.xlu0 42
        %1540 = vperm.xlu0 %1539, %v483
        %v1541 = vpop.permute.xlu0 %1540
        %v1543 = vmul.f32 %v1541, %v1537
        %v1544 = vmul.f32 %v1541, %v1538
        %v1545 = vadd.f32 %v1453, %v1543
        %v1546 = vadd.f32 %v1454, %v1544
        %1547 = vrot.lane.b32.xlu0 %v481, 82
        %v1548 = vpop.permute.xlu0 %1547
        %1549 = vrot.lane.b32.xlu0 %v482, 82
        %v1550 = vpop.permute.xlu0 %1549
        %vm1551 = vcmp.lt.s32.totalorder %v342, 82
        %v1552 = vsel %vm1551, %v1548, %v1550
        %v1553 = vsel %vm1551, %v1550, %v1548
        %vm1554 = vmand %vm528, %vm540
        %vm1555 = vmand %vm529, %vm541
        %v1556 = vsel %vm1554, 1, 0
        %v1557 = vsel %vm1555, 1, 0
        %vm1558 = vcmp.eq.s32.totalorder %v1556, 1
        %vm1559 = vcmp.eq.s32.totalorder %v1557, 1
        %v1560 = vsel %vm1558, %v1552, 0.0
        %v1561 = vsel %vm1559, %v1553, 0.0
        %1562 = vset.pattern.permute.xlu0 43
        %1563 = vperm.xlu0 %1562, %v483
        %v1564 = vpop.permute.xlu0 %1563
        %v1566 = vmul.f32 %v1564, %v1560
        %v1567 = vmul.f32 %v1564, %v1561
        %v1568 = vadd.f32 %v1476, %v1566
        %v1569 = vadd.f32 %v1477, %v1567
        %1570 = vrot.lane.b32.xlu0 %v481, 81
        %v1571 = vpop.permute.xlu0 %1570
        %1572 = vrot.lane.b32.xlu0 %v482, 81
        %v1573 = vpop.permute.xlu0 %1572
        %vm1574 = vcmp.lt.s32.totalorder %v342, 81
        %v1575 = vsel %vm1574, %v1571, %v1573
        %v1576 = vsel %vm1574, %v1573, %v1571
        %vm1577 = vmand %vm528, %vm546
        %vm1578 = vmand %vm529, %vm547
        %v1579 = vsel %vm1577, 1, 0
        %v1580 = vsel %vm1578, 1, 0
        %vm1581 = vcmp.eq.s32.totalorder %v1579, 1
        %vm1582 = vcmp.eq.s32.totalorder %v1580, 1
        %v1583 = vsel %vm1581, %v1575, 0.0
        %v1584 = vsel %vm1582, %v1576, 0.0
        %1585 = vset.pattern.permute.xlu0 44
        %1586 = vperm.xlu0 %1585, %v483
        %v1587 = vpop.permute.xlu0 %1586
        %v1589 = vmul.f32 %v1587, %v1583
        %v1590 = vmul.f32 %v1587, %v1584
        %v1591 = vadd.f32 %v1499, %v1589
        %v1592 = vadd.f32 %v1500, %v1590
        %1593 = vrot.lane.b32.xlu0 %v481, 80
        %v1594 = vpop.permute.xlu0 %1593
        %1595 = vrot.lane.b32.xlu0 %v482, 80
        %v1596 = vpop.permute.xlu0 %1595
        %vm1597 = vcmp.lt.s32.totalorder %v342, 80
        %v1598 = vsel %vm1597, %v1594, %v1596
        %v1599 = vsel %vm1597, %v1596, %v1594
        %vm1600 = vmand %vm528, %vm552
        %vm1601 = vmand %vm529, %vm553
        %v1602 = vsel %vm1600, 1, 0
        %v1603 = vsel %vm1601, 1, 0
        %vm1604 = vcmp.eq.s32.totalorder %v1602, 1
        %vm1605 = vcmp.eq.s32.totalorder %v1603, 1
        %v1606 = vsel %vm1604, %v1598, 0.0
        %v1607 = vsel %vm1605, %v1599, 0.0
        %1608 = vset.pattern.permute.xlu0 45
        %1609 = vperm.xlu0 %1608, %v483
        %v1610 = vpop.permute.xlu0 %1609
        %v1612 = vmul.f32 %v1610, %v1606
        %v1613 = vmul.f32 %v1610, %v1607
        %v1614 = vadd.f32 %v1522, %v1612
        %v1615 = vadd.f32 %v1523, %v1613
        %1616 = vrot.lane.b32.xlu0 %v481, 79
        %v1617 = vpop.permute.xlu0 %1616
        %1618 = vrot.lane.b32.xlu0 %v482, 79
        %v1619 = vpop.permute.xlu0 %1618
        %vm1620 = vcmp.lt.s32.totalorder %v342, 79
        %v1621 = vsel %vm1620, %v1617, %v1619
        %v1622 = vsel %vm1620, %v1619, %v1617
        %vm1623 = vmand %vm528, %vm558
        %vm1624 = vmand %vm529, %vm559
        %v1625 = vsel %vm1623, 1, 0
        %v1626 = vsel %vm1624, 1, 0
        %vm1627 = vcmp.eq.s32.totalorder %v1625, 1
        %vm1628 = vcmp.eq.s32.totalorder %v1626, 1
        %v1629 = vsel %vm1627, %v1621, 0.0
        %v1630 = vsel %vm1628, %v1622, 0.0
        %1631 = vset.pattern.permute.xlu0 46
        %1632 = vperm.xlu0 %1631, %v483
        %v1633 = vpop.permute.xlu0 %1632
        %v1635 = vmul.f32 %v1633, %v1629
        %v1636 = vmul.f32 %v1633, %v1630
        %v1637 = vadd.f32 %v1545, %v1635
        %v1638 = vadd.f32 %v1546, %v1636
        %1639 = vrot.lane.b32.xlu0 %v481, 78
        %v1640 = vpop.permute.xlu0 %1639
        %1641 = vrot.lane.b32.xlu0 %v482, 78
        %v1642 = vpop.permute.xlu0 %1641
        %vm1643 = vcmp.lt.s32.totalorder %v342, 78
        %v1644 = vsel %vm1643, %v1640, %v1642
        %v1645 = vsel %vm1643, %v1642, %v1640
        %vm1646 = vmand %vm528, %vm564
        %vm1647 = vmand %vm529, %vm565
        %v1648 = vsel %vm1646, 1, 0
        %v1649 = vsel %vm1647, 1, 0
        %vm1650 = vcmp.eq.s32.totalorder %v1648, 1
        %vm1651 = vcmp.eq.s32.totalorder %v1649, 1
        %v1652 = vsel %vm1650, %v1644, 0.0
        %v1653 = vsel %vm1651, %v1645, 0.0
        %1654 = vset.pattern.permute.xlu0 47
        %1655 = vperm.xlu0 %1654, %v483
        %v1656 = vpop.permute.xlu0 %1655
        %v1658 = vmul.f32 %v1656, %v1652
        %v1659 = vmul.f32 %v1656, %v1653
        %v1660 = vadd.f32 %v1568, %v1658
        %v1661 = vadd.f32 %v1569, %v1659
        %1662 = vrot.lane.b32.xlu0 %v481, 77
        %v1663 = vpop.permute.xlu0 %1662
        %1664 = vrot.lane.b32.xlu0 %v482, 77
        %v1665 = vpop.permute.xlu0 %1664
        %vm1666 = vcmp.lt.s32.totalorder %v342, 77
        %v1667 = vsel %vm1666, %v1663, %v1665
        %v1668 = vsel %vm1666, %v1665, %v1663
        %vm1669 = vmand %vm528, %vm570
        %vm1670 = vmand %vm529, %vm571
        %v1671 = vsel %vm1669, 1, 0
        %v1672 = vsel %vm1670, 1, 0
        %vm1673 = vcmp.eq.s32.totalorder %v1671, 1
        %vm1674 = vcmp.eq.s32.totalorder %v1672, 1
        %v1675 = vsel %vm1673, %v1667, 0.0
        %v1676 = vsel %vm1674, %v1668, 0.0
        %1677 = vset.pattern.permute.xlu0 48
        %1678 = vperm.xlu0 %1677, %v483
        %v1679 = vpop.permute.xlu0 %1678
        %v1681 = vmul.f32 %v1679, %v1675
        %v1682 = vmul.f32 %v1679, %v1676
        %v1683 = vadd.f32 %v1591, %v1681
        %v1684 = vadd.f32 %v1592, %v1682
        %v1685 = vadd.f32 %v1683, %v1614
        %v1686 = vadd.f32 %v1684, %v1615
        %v1687 = vadd.f32 %v1637, %v1660
        %v1688 = vadd.f32 %v1638, %v1661
        %v1689 = vadd.f32 %v1685, %v1687
        %v1690 = vadd.f32 %v1686, %v1688
        %v1693 = vrot.slane %v1689, 1
        %v1694 = vrot.slane %v1690, 1
        %v1697 = vadd.f32 %v1689, %v1693
        %v1698 = vadd.f32 %v1690, %v1694
        %v1699 = vstv %s484
        %v1700 = vadd.f32 %v1697, %v1699
        %v1701 = vadd.f32 %v1698, %v1699
        %v1702 = vxor.u32 %v1700, 2147483648
        %v1703 = vxor.u32 %v1701, 2147483648
        %v1704 = vmul.f32 %v1702, 1.442695
        %v1705 = vpow.pop %v1704
        %v1706 = vmul.f32 %v1703, 1.442695
        %v1707 = vpow.pop %v1706
        %v1708 = vadd.f32 %v1705, 1.0
        %v1709 = vadd.f32 %v1707, 1.0
        %v1710 = vrcp.pop %v1708
        %v1711 = vmul.f32 1.0, %v1710
        %v1712 = vrcp.pop %v1709
        %v1713 = vmul.f32 1.0, %v1712
        %v1714 = vlaneseq
        %v1715 = vshrl.u32 %v1714, 7
        %v1716 = vsub.s32 0, %v1715
        %v1717 = vrot.slane %v1711, %v1716
        %v1718 = vlaneseq
        %v1719 = vshrl.u32 %v1718, 7
        %v1720 = vsub.s32 0, %v1719
        %v1721 = vrot.slane %v1713, %v1720
        %v1722 = vmul.f32 %v434, %v1717
        %v1723 = vmul.f32 %v435, %v1721
        %v1724 = vmul.f32 %v436, %v1717
        %v1725 = vmul.f32 %v437, %v1721
        %v1726 = vmul.f32 %v438, %v1717
        %v1727 = vmul.f32 %v439, %v1721
        %v1728 = vmul.f32 %v440, %v1717
        %v1729 = vmul.f32 %v441, %v1721
        %1730 = vst [vmem:[%s243] sm:$0xff] %v1722
        %1731 = vst [vmem:[%s243 + $0x8] sm:$0xff] %v1723
        %1732 = vst [vmem:[%s243 + $0x10] sm:$0xff] %v1724
        %1733 = vst [vmem:[%s243 + $0x18] sm:$0xff] %v1725
        %1734 = vst [vmem:[%s243 + $0x20] sm:$0xff] %v1726
        %1735 = vst [vmem:[%s243 + $0x28] sm:$0xff] %v1727
        %1736 = vst [vmem:[%s243 + $0x30] sm:$0xff] %v1728
        %1737 = vst [vmem:[%s243 + $0x38] sm:$0xff] %v1729
        %s1738 = sand.u32 %s141, 1
        %s1739 = scalar_lea.sflag [#allocation5], %s1738
        %s1740 = sand.u32 %s141, 1
        %s1741 = smul.addr %s1740, 64
        %s1742 = scalar_lea.vmem [#allocation6], %s1741
        // Predicated region
        $region45: #{tpu_custom_call.1} parent=39 // pred_check
          %p1743 = pneg %p151
        $region46: #{tpu_custom_call.1} parent=39 // pred_check_branch
          %1745 = sbr.rel (%p1743) target = $region48
        $region47: #{tpu_custom_call.1} parent=39 // pred_region
          %s1747 = ssub.s32 1024, 1024
          %1748 = vsyncadd %s1739, %s1747
          %s1749 = smul.addr %s23, 8
          %s1750 = smul.addr %s1749, 128
          %s1751 = scalar_lea.hbm %s5, %s1750
          %s1752 = sshll.u32 %s1742, 4
          %s1753 = int_to_ptr.vmem [resolvable:$true] %s1752
          %1758 = dma.vmem_to_hbm [thread:$0]  %s1753, 1024, %s1751, %s1739, 256, 256, 16
        $region48: #{tpu_custom_call.1} parent=39 // pred_fallthru
          _
      $region40: #{tpu_custom_call.1} parent=5 // pred_fallthru
        _
      %p1759 = scmp.le.s32.totalorder 2, %s18
      // Predicated region
      $region49: #{tpu_custom_call.1} parent=5 // pred_check
        %p1760 = pneg %p1759
      $region50: #{tpu_custom_call.1} parent=5 // pred_check_branch
        %1762 = sbr.rel (%p1760) target = $region52
      $region51: #{tpu_custom_call.1} parent=5 // pred_region
        %s1763 = ssub.s32 %s18, 2
        // Predicated region
        $region53: #{tpu_custom_call.1} parent=51 // pred_check
          %p1764 = pneg %p157
        $region54: #{tpu_custom_call.1} parent=51 // pred_check_branch
          %1766 = sbr.rel (%p1764) target = $region56
        $region55: #{tpu_custom_call.1} parent=51 // pred_region
          %s1767 = sand.u32 %s142, 1
          %s1768 = scalar_lea.sflag [#allocation5], %s1767
          %s1769 = sand.u32 %s142, 1
          %s1770 = smul.addr %s1769, 64
          %s1771 = scalar_lea.vmem [#allocation6], %s1770
          %1772 = dma.done %s1768, 1024
        $region56: #{tpu_custom_call.1} parent=51 // pred_fallthru
          _
      $region52: #{tpu_custom_call.1} parent=5 // pred_fallthru
        _
    $region6: #{tpu_custom_call.1} parent=1 // loop_footer
      %s22 = sadd.s32 1, %s18
    $region7: #{tpu_custom_call.1} parent=1 // loop_footer_branch
      %17 = sbr.rel target = $region3
    $region8: #{tpu_custom_call.1} parent=1 // loop_exit
      _
    %1773 = vsyncpa [#allocation4], 1
    %s1774 = scalar_lea.sflag [#allocation4], 1
    %1775 = vsyncpa %s1774, 1
    %1776 = vsyncpa [#allocation5], 1
    %s1777 = scalar_lea.sflag [#allocation5], 1
    %1778 = vsyncpa %s1777, 1

</llo_original>
